<compile_context>
chip_gen: v5e
topology: v5e:2x2
jax: 0.10.0
libtpu: 0.0.40
codegen_flags: <defaults>
</compile_context>

<pallas_src>
import functools

import jax
import jax.numpy as jnp
from jax.experimental import pallas as pl
from jax.experimental.pallas import tpu as pltpu


# ------------------------------ fused kernel ------------------------------- #
def _textrcnn_kernel(x_ref,      # [T*Bt, E]   time-major embeddings (bf16)
                     wih_ref,    # [E, 10H]    [gate pairs (8H) | w1_emb (2H)] bf16
                     bih_ref,    # [1, 10H]    [gate biases     | b1        ] f32
                     whh_ref,    # [2H, 8H]    recurrent weight, pair layout, bf16
                     w1l_ref,    # [2H, 2H]    fc weight acting on lstm output, bf16
                     w2_ref,     # [2H, Lpad]  classifier (lane-padded), bf16
                     b2_ref,     # [1, Lpad]   f32
                     out_ref,    # [Bt, Lpad]  logits (f32)
                     hid_ref,    # scratch VMEM [T*Bt, 2H] f32
                     *, seq_len, batch_tile):
    T, B = seq_len, batch_tile
    G = whh_ref.shape[1]                     # 8H (gate-pair columns)
    H = G // 8
    H2, H6 = 2 * H, 6 * H

    x = x_ref[...]                                               # [T*B, E] bf16

    # ---- hoisted pre-pass: ONE MXU pass gives gate pre-activations for both
    #      directions and all timesteps (cols :8H) AND the fc-layer embedding
    #      contribution (cols 8H:10H).  Biases (incl. b1) are folded in.
    xproj = (jnp.dot(x, wih_ref[...], preferred_element_type=jnp.float32)
             + bih_ref[...])                                     # [T*B, 10H] f32
    gates_x = xproj[:, :G]                                       # [T*B, 8H]
    emb_fc = xproj[:, G:]                                        # [T*B, 2H]

    # ---- hoisted time alignment: backward-gate lanes of step t come from the
    #      time-reversed row block (T-1-t).  Independent of the recurrence.
    lane = jax.lax.broadcasted_iota(jnp.int32, (B, G), 1)
    fwd_lane = (lane % H2) < H               # forward half of each gate pair
    xg = [jnp.where(fwd_lane,
                    gates_x[t * B:(t + 1) * B, :],
                    gates_x[(T - 1 - t) * B:(T - t) * B, :])
          for t in range(T)]

    whh = whh_ref[...]                                           # [2H, 8H] bf16

    # ---- fully-unrolled bidirectional recurrence: one MXU push per step,
    #      full-width [B, 2H] gate math, no per-step concats.
    c = jnp.zeros((B, H2), jnp.float32)                          # [c_f | c_b]
    h = jnp.zeros((B, H2), jnp.float32)                          # [h_f | h_b]
    for t in range(T):
        g = jnp.dot(h.astype(whh.dtype), whh,
                    preferred_element_type=jnp.float32) + xg[t]  # [B, 8H]
        sig = jax.nn.sigmoid(g[:, :H6])                          # i | f | o pairs
        g_t = jnp.tanh(g[:, H6:])                                # g pair
        c = sig[:, H2:2 * H2] * c + sig[:, :H2] * g_t
        h = sig[:, 2 * H2:] * jnp.tanh(c)
        # scatter into the time-major hidden scratch: h_f belongs to output
        # position t, h_b to position T-1-t.  Keeps vreg live ranges short.
        hid_ref[t * B:(t + 1) * B, :H] = h[:, :H]
        hid_ref[(T - 1 - t) * B:(T - t) * B, H:] = h[:, H:]

    # ---- fused head: fc -> tanh -> maxpool(T) -> (dropout=id) -> classifier
    hid = hid_ref[...].astype(w1l_ref.dtype)                     # [T*B, 2H]
    fc = jnp.tanh(jnp.dot(hid, w1l_ref[...],
                          preferred_element_type=jnp.float32) + emb_fc)
    pooled = fc[0:B, :]
    for t in range(1, T):
        pooled = jnp.maximum(pooled, fc[t * B:(t + 1) * B, :])
    # TODO(synk): dropout is identity here (eval-mode semantics).
    out_ref[...] = (jnp.dot(pooled.astype(w2_ref.dtype), w2_ref[...],
                            preferred_element_type=jnp.float32) + b2_ref[...])


# ------------------------------ param repack -------------------------------- #
_PT_GATE = {"i": 0, "f": 1, "g": 2, "o": 3}       # PyTorch nn.LSTM column order
_KERNEL_GATE = ("i", "f", "o", "g")               # kernel pair order: sig,sig,sig,tanh


def fuse_params(params, lane_pad=128):
    """One-time host-side repack into kernel-ready fused tensors (bf16 matmul
    operands, f32 biases)."""
    H = params["whh_f"].shape[0]
    L = params["w2"].shape[1]

    def pair_cols(w_f, w_b):
        cols = []
        for gname in _KERNEL_GATE:
            k = _PT_GATE[gname]
            cols.append(w_f[:, k * H:(k + 1) * H])
            cols.append(w_b[:, k * H:(k + 1) * H])
        return jnp.concatenate(cols, axis=1)

    wih_pairs = pair_cols(params["wih_f"], params["wih_b"])        # [E, 8H]
    b_pairs = pair_cols(params["b_f"], params["b_b"])              # [1, 8H]

    # Recurrent weight: rows [h_f | h_b]; h_f drives the forward half of each
    # gate pair, h_b the backward half (everything else stays zero).
    whh = jnp.zeros((2 * H, 8 * H), jnp.float32)
    for p, gname in enumerate(_KERNEL_GATE):
        k = _PT_GATE[gname]
        whh = whh.at[:H, (2 * p) * H:(2 * p + 1) * H].set(
            params["whh_f"][:, k * H:(k + 1) * H])
        whh = whh.at[H:, (2 * p + 1) * H:(2 * p + 2) * H].set(
            params["whh_b"][:, k * H:(k + 1) * H])

    # Input weight fused with the fc layer's embedding contribution -> [E, 10H]
    wih_all = jnp.concatenate([wih_pairs, params["w1_emb"]], axis=1)
    bih_all = jnp.concatenate([b_pairs, params["b1"]], axis=1)

    # Classifier padded to a lane-dense width (zeros past num_label).
    Lp = ((L + lane_pad - 1) // lane_pad) * lane_pad
    w2 = jnp.zeros((2 * H, Lp), jnp.float32).at[:, :L].set(params["w2"])
    b2 = jnp.zeros((1, Lp), jnp.float32).at[:, :L].set(params["b2"])

    bf16 = jnp.bfloat16
    return {
        "embedding": params["embedding"],
        "wih_all": wih_all.astype(bf16),
        "bih_all": bih_all,                 # f32, added after f32 accumulation
        "whh": whh.astype(bf16),
        "w1_lstm": params["w1_lstm"].astype(bf16),
        "w2": w2.astype(bf16),
        "b2": b2,
    }


# ------------------------------ wrapper ------------------------------------- #
def textrcnn_forward(sentences, sentence_lengths, fused, *, num_label,
                     batch_tile=8):
    # TODO(synk): length masking (pack_padded_sequence semantics) not
    #             replicated; all sequences run to max_seq_len.
    del sentence_lengths
    B, T = sentences.shape
    E = fused["embedding"].shape[1]
    H2 = fused["w1_lstm"].shape[0]
    Lp = fused["w2"].shape[1]

    # Pad the batch to a sublane-aligned tile; larger batches get a parallel
    # grid axis so both v7x TensorCores are used (harmless on v5e/v6e).
    Bt = batch_tile
    B_pad = ((B + Bt - 1) // Bt) * Bt
    if B_pad != B:
        sentences = jnp.pad(sentences, ((0, B_pad - B), (0, 0)))
    n_tiles = B_pad // Bt

    # Embedding gather stays in XLA glue (table lives in HBM at scale).
    embeds = jnp.take(fused["embedding"], sentences, axis=0)       # [B_pad, T, E]
    # Per-tile time-major layout [n_tiles, T*Bt, E] (layout plumbing in XLA).
    x = jnp.transpose(embeds, (1, 0, 2)).reshape(T, n_tiles, Bt, E)
    x = jnp.transpose(x, (1, 0, 2, 3)).reshape(n_tiles, T * Bt, E)
    x = x.astype(jnp.bfloat16)

    def full_spec(arr):
        nd = arr.ndim
        return pl.BlockSpec(arr.shape, lambda i, _nd=nd: (0,) * _nd)

    kernel = functools.partial(_textrcnn_kernel, seq_len=T, batch_tile=Bt)
    # NOTE: when scaling Bt toward >=128/256 MXU rows, budget the f32
    # intermediates (~T*Bt*12H*4B) against v7x's 64 MiB VMEM and raise
    # pltpu.CompilerParams(vmem_limit_bytes=...) past the scoped default.
    out = pl.pallas_call(
        kernel,
        out_shape=jax.ShapeDtypeStruct((B_pad, Lp), jnp.float32),
        grid=(n_tiles,),
        in_specs=[
            pl.BlockSpec((None, T * Bt, E), lambda i: (i, 0, 0)),
            full_spec(fused["wih_all"]),
            full_spec(fused["bih_all"]),
            full_spec(fused["whh"]),
            full_spec(fused["w1_lstm"]),
            full_spec(fused["w2"]),
            full_spec(fused["b2"]),
        ],
        out_specs=pl.BlockSpec((Bt, Lp), lambda i: (i, 0)),
        scratch_shapes=[pltpu.VMEM((T * Bt, H2), jnp.float32)],
        compiler_params=pltpu.CompilerParams(
            dimension_semantics=("parallel",)),
    )(x, fused["wih_all"], fused["bih_all"], fused["whh"],
      fused["w1_lstm"], fused["w2"], fused["b2"])
    return out[:B, :num_label]


# --------------------------------- setup ------------------------------------ #
def make_params(key, vocab_size, embed_dim, hidden_size, num_label):
    ks = jax.random.split(key, 11)
    H, E = hidden_size, embed_dim
    lstm_bound = 1.0 / jnp.sqrt(H)
    fc_in = 2 * H + E
    fc_bound = 1.0 / jnp.sqrt(fc_in)
    cls_bound = 1.0 / jnp.sqrt(2 * H)

    def u(k, shape, bound):
        return jax.random.uniform(k, shape, jnp.float32, -bound, bound)

    # fc weight generated as one [2H+E, 2H] matrix then split to mirror
    # torch.cat((lstm_output, embeds), -1) @ W.T  (lstm part first).
    w1 = u(ks[7], (fc_in, 2 * H), fc_bound)
    return {
        "embedding": jax.random.normal(ks[0], (vocab_size, E), jnp.float32),
        # PyTorch nn.LSTM gate order i,f,g,o; (b_ih + b_hh) folded into one bias.
        "wih_f": u(ks[1], (E, 4 * H), lstm_bound),
        "whh_f": u(ks[2], (H, 4 * H), lstm_bound),
        "b_f":   u(ks[3], (1, 4 * H), lstm_bound),
        "wih_b": u(ks[4], (E, 4 * H), lstm_bound),
        "whh_b": u(ks[5], (H, 4 * H), lstm_bound),
        "b_b":   u(ks[6], (1, 4 * H), lstm_bound),
        "w1_lstm": w1[:2 * H, :],
        "w1_emb":  w1[2 * H:, :],
        "b1": u(ks[8], (1, 2 * H), fc_bound),
        "w2": u(ks[9], (2 * H, num_label), cls_bound),
        "b2": u(ks[10], (1, num_label), cls_bound),
    }


if __name__ == "__main__":
    # small config consistent with the module
    batch = 2
    max_seq_len = 8
    vocab_size = 100
    embed_dim = 32
    hidden_size = 32
    num_label = 4

    key = jax.random.PRNGKey(0)
    pkey, skey = jax.random.split(key)
    params = make_params(pkey, vocab_size, embed_dim, hidden_size, num_label)
    fused = fuse_params(params)

    sentences = jax.random.randint(skey, (batch, max_seq_len), 0, vocab_size,
                                   dtype=jnp.int32)
    sentence_lengths = jnp.full((batch,), max_seq_len, dtype=jnp.int32)

    fwd_fn = jax.jit(functools.partial(textrcnn_forward, num_label=num_label))
    logits = fwd_fn(sentences, sentence_lengths, fused)
    jax.block_until_ready(logits)
    assert logits.shape == (batch, num_label)
    print("KERNEL_OK")
</pallas_src>

<mosaic_0001>
module attributes {stable_mosaic.version = 11 : i64} {
  func.func @_textrcnn_kernel(%arg0: i32, %arg1: memref<1x64x32xbf16, #tpu.memory_space<vmem>>, %arg2: memref<32x320xbf16, #tpu.memory_space<vmem>>, %arg3: memref<1x320xf32, #tpu.memory_space<vmem>>, %arg4: memref<64x256xbf16, #tpu.memory_space<vmem>>, %arg5: memref<64x64xbf16, #tpu.memory_space<vmem>>, %arg6: memref<64x128xbf16, #tpu.memory_space<vmem>>, %arg7: memref<1x128xf32, #tpu.memory_space<vmem>>, %arg8: memref<8x128xf32, #tpu.memory_space<vmem>>, %arg9: memref<64x64xf32, #tpu.memory_space<vmem>>) attributes {dimension_semantics = [#tpu.dimension_semantics<parallel>], iteration_bounds = array<i64: 1>, scalar_prefetch = 0 : i64, scratch_operands = 1 : i64, tpu.core_type = #tpu.core_type<tc>, window_params = [{transform_indices = @transform_0, window_bounds = array<i64: 1, 64, 32>}, {pipeline_mode = #tpu.pipeline_mode<synchronous>, transform_indices = @transform_1, window_bounds = array<i64: 32, 320>}, {pipeline_mode = #tpu.pipeline_mode<synchronous>, transform_indices = @transform_2, window_bounds = array<i64: 1, 320>}, {pipeline_mode = #tpu.pipeline_mode<synchronous>, transform_indices = @transform_3, window_bounds = array<i64: 64, 256>}, {pipeline_mode = #tpu.pipeline_mode<synchronous>, transform_indices = @transform_4, window_bounds = array<i64: 64, 64>}, {pipeline_mode = #tpu.pipeline_mode<synchronous>, transform_indices = @transform_5, window_bounds = array<i64: 64, 128>}, {pipeline_mode = #tpu.pipeline_mode<synchronous>, transform_indices = @transform_6, window_bounds = array<i64: 1, 128>}, {transform_indices = @transform_7, window_bounds = array<i64: 8, 128>}]} {
    %c0 = arith.constant 0 : index
    %c0_0 = arith.constant 0 : index
    %c0_1 = arith.constant 0 : index
    %0 = vector.load %arg1[%c0, %c0_0, %c0_1] : memref<1x64x32xbf16, #tpu.memory_space<vmem>>, vector<1x64x32xbf16>
    %1 = vector.shape_cast %0 : vector<1x64x32xbf16> to vector<64x32xbf16>
    %c0_2 = arith.constant 0 : index
    %c0_3 = arith.constant 0 : index
    %2 = vector.load %arg2[%c0_2, %c0_3] : memref<32x320xbf16, #tpu.memory_space<vmem>>, vector<32x320xbf16>
    %cst = arith.constant dense<0.000000e+00> : vector<64x320xf32>
    %3 = tpu.matmul %1, %2, %cst {dimension_numbers = #tpu.dot_dimension_numbers<[1], [0], [0], [1], [0, 0, 1, 1], [], []>} : vector<64x32xbf16>, vector<32x320xbf16>, vector<64x320xf32> -> vector<64x320xf32>
    %c0_4 = arith.constant 0 : index
    %c0_5 = arith.constant 0 : index
    %4 = vector.load %arg3[%c0_4, %c0_5] : memref<1x320xf32, #tpu.memory_space<vmem>>, vector<1x320xf32>
    %5 = vector.broadcast %4 : vector<1x320xf32> to vector<64x320xf32>
    %6 = arith.addf %3, %5 : vector<64x320xf32>
    %7 = vector.extract_strided_slice %6 {offsets = [0, 0], sizes = [64, 256], strides = [1, 1]} : vector<64x320xf32> to vector<64x256xf32>
    %8 = vector.extract_strided_slice %6 {offsets = [0, 256], sizes = [64, 64], strides = [1, 1]} : vector<64x320xf32> to vector<64x64xf32>
    %9 = tpu.iota {dimensions = array<i32: 1>} : vector<8x256xi32>
    %c64_i32 = arith.constant 64 : i32
    %c0_i32 = arith.constant 0 : i32
    %10 = arith.cmpi eq, %c64_i32, %c0_i32 : i32
    %c1_i32 = arith.constant 1 : i32
    %11 = arith.select %10, %c1_i32, %c64_i32 : i32
    %12 = vector.broadcast %11 : i32 to vector<8x256xi32>
    %13 = arith.remsi %9, %12 : vector<8x256xi32>
    %c0_i32_6 = arith.constant 0 : i32
    %14 = vector.broadcast %c0_i32_6 : i32 to vector<8x256xi32>
    %15 = arith.cmpi ne, %13, %14 : vector<8x256xi32>
    %c0_i32_7 = arith.constant 0 : i32
    %16 = vector.broadcast %c0_i32_7 : i32 to vector<8x256xi32>
    %17 = arith.cmpi slt, %13, %16 : vector<8x256xi32>
    %c0_i32_8 = arith.constant 0 : i32
    %18 = arith.cmpi slt, %11, %c0_i32_8 : i32
    %19 = vector.broadcast %18 : i1 to vector<8x256xi1>
    %20 = vector.broadcast %19 : vector<8x256xi1> to vector<8x256xi1>
    %21 = arith.xori %17, %20 : vector<8x256xi1>
    %22 = arith.andi %21, %15 : vector<8x256xi1>
    %23 = vector.broadcast %11 : i32 to vector<8x256xi32>
    %24 = arith.addi %13, %23 : vector<8x256xi32>
    %25 = arith.select %22, %24, %13 : vector<8x256xi1>, vector<8x256xi32>
    %c32_i32 = arith.constant 32 : i32
    %26 = vector.broadcast %c32_i32 : i32 to vector<8x256xi32>
    %27 = arith.cmpi slt, %25, %26 : vector<8x256xi32>
    %28 = vector.extract_strided_slice %7 {offsets = [0, 0], sizes = [8, 256], strides = [1, 1]} : vector<64x256xf32> to vector<8x256xf32>
    %29 = vector.extract_strided_slice %7 {offsets = [56, 0], sizes = [8, 256], strides = [1, 1]} : vector<64x256xf32> to vector<8x256xf32>
    %30 = arith.select %27, %28, %29 : vector<8x256xi1>, vector<8x256xf32>
    %31 = vector.extract_strided_slice %7 {offsets = [8, 0], sizes = [8, 256], strides = [1, 1]} : vector<64x256xf32> to vector<8x256xf32>
    %32 = vector.extract_strided_slice %7 {offsets = [48, 0], sizes = [8, 256], strides = [1, 1]} : vector<64x256xf32> to vector<8x256xf32>
    %33 = arith.select %27, %31, %32 : vector<8x256xi1>, vector<8x256xf32>
    %34 = vector.extract_strided_slice %7 {offsets = [16, 0], sizes = [8, 256], strides = [1, 1]} : vector<64x256xf32> to vector<8x256xf32>
    %35 = vector.extract_strided_slice %7 {offsets = [40, 0], sizes = [8, 256], strides = [1, 1]} : vector<64x256xf32> to vector<8x256xf32>
    %36 = arith.select %27, %34, %35 : vector<8x256xi1>, vector<8x256xf32>
    %37 = vector.extract_strided_slice %7 {offsets = [24, 0], sizes = [8, 256], strides = [1, 1]} : vector<64x256xf32> to vector<8x256xf32>
    %38 = vector.extract_strided_slice %7 {offsets = [32, 0], sizes = [8, 256], strides = [1, 1]} : vector<64x256xf32> to vector<8x256xf32>
    %39 = arith.select %27, %37, %38 : vector<8x256xi1>, vector<8x256xf32>
    %40 = vector.extract_strided_slice %7 {offsets = [32, 0], sizes = [8, 256], strides = [1, 1]} : vector<64x256xf32> to vector<8x256xf32>
    %41 = vector.extract_strided_slice %7 {offsets = [24, 0], sizes = [8, 256], strides = [1, 1]} : vector<64x256xf32> to vector<8x256xf32>
    %42 = arith.select %27, %40, %41 : vector<8x256xi1>, vector<8x256xf32>
    %43 = vector.extract_strided_slice %7 {offsets = [40, 0], sizes = [8, 256], strides = [1, 1]} : vector<64x256xf32> to vector<8x256xf32>
    %44 = vector.extract_strided_slice %7 {offsets = [16, 0], sizes = [8, 256], strides = [1, 1]} : vector<64x256xf32> to vector<8x256xf32>
    %45 = arith.select %27, %43, %44 : vector<8x256xi1>, vector<8x256xf32>
    %46 = vector.extract_strided_slice %7 {offsets = [48, 0], sizes = [8, 256], strides = [1, 1]} : vector<64x256xf32> to vector<8x256xf32>
    %47 = vector.extract_strided_slice %7 {offsets = [8, 0], sizes = [8, 256], strides = [1, 1]} : vector<64x256xf32> to vector<8x256xf32>
    %48 = arith.select %27, %46, %47 : vector<8x256xi1>, vector<8x256xf32>
    %49 = vector.extract_strided_slice %7 {offsets = [56, 0], sizes = [8, 256], strides = [1, 1]} : vector<64x256xf32> to vector<8x256xf32>
    %50 = vector.extract_strided_slice %7 {offsets = [0, 0], sizes = [8, 256], strides = [1, 1]} : vector<64x256xf32> to vector<8x256xf32>
    %51 = arith.select %27, %49, %50 : vector<8x256xi1>, vector<8x256xf32>
    %c0_9 = arith.constant 0 : index
    %c0_10 = arith.constant 0 : index
    %52 = vector.load %arg4[%c0_9, %c0_10] : memref<64x256xbf16, #tpu.memory_space<vmem>>, vector<64x256xbf16>
    %cst_11 = arith.constant 0.000000e+00 : f32
    %53 = vector.broadcast %cst_11 : f32 to vector<8x64xf32>
    %cst_12 = arith.constant 0.000000e+00 : f32
    %54 = vector.broadcast %cst_12 : f32 to vector<8x64xf32>
    %55 = arith.truncf %54 : vector<8x64xf32> to vector<8x64xbf16>
    %cst_13 = arith.constant dense<0.000000e+00> : vector<8x256xf32>
    %56 = tpu.matmul %55, %52, %cst_13 {dimension_numbers = #tpu.dot_dimension_numbers<[1], [0], [0], [1], [0, 0, 1, 1], [], []>} : vector<8x64xbf16>, vector<64x256xbf16>, vector<8x256xf32> -> vector<8x256xf32>
    %57 = arith.addf %56, %30 : vector<8x256xf32>
    %58 = vector.extract_strided_slice %57 {offsets = [0, 0], sizes = [8, 192], strides = [1, 1]} : vector<8x256xf32> to vector<8x192xf32>
    %59 = arith.negf %58 : vector<8x192xf32>
    %60 = math.exp %59 : vector<8x192xf32>
    %cst_14 = arith.constant 1.000000e+00 : f32
    %61 = vector.broadcast %cst_14 : f32 to vector<8x192xf32>
    %62 = arith.addf %61, %60 : vector<8x192xf32>
    %63 = arith.divf %61, %62 : vector<8x192xf32>
    %64 = vector.extract_strided_slice %57 {offsets = [0, 192], sizes = [8, 64], strides = [1, 1]} : vector<8x256xf32> to vector<8x64xf32>
    %65 = math.tanh %64 : vector<8x64xf32>
    %66 = vector.extract_strided_slice %63 {offsets = [0, 64], sizes = [8, 64], strides = [1, 1]} : vector<8x192xf32> to vector<8x64xf32>
    %67 = arith.mulf %66, %53 : vector<8x64xf32>
    %68 = vector.extract_strided_slice %63 {offsets = [0, 0], sizes = [8, 64], strides = [1, 1]} : vector<8x192xf32> to vector<8x64xf32>
    %69 = arith.mulf %68, %65 : vector<8x64xf32>
    %70 = arith.addf %67, %69 : vector<8x64xf32>
    %71 = vector.extract_strided_slice %63 {offsets = [0, 128], sizes = [8, 64], strides = [1, 1]} : vector<8x192xf32> to vector<8x64xf32>
    %72 = math.tanh %70 : vector<8x64xf32>
    %73 = arith.mulf %71, %72 : vector<8x64xf32>
    %74 = vector.extract_strided_slice %73 {offsets = [0, 0], sizes = [8, 32], strides = [1, 1]} : vector<8x64xf32> to vector<8x32xf32>
    %c0_15 = arith.constant 0 : index
    %c0_16 = arith.constant 0 : index
    %75 = vector.load %arg9[%c0_15, %c0_16] : memref<64x64xf32, #tpu.memory_space<vmem>>, vector<8x32xf32>
    tpu.vector_store %arg9[%c0_15, %c0_16], %74 {strides = array<i32>} : memref<64x64xf32, #tpu.memory_space<vmem>>, vector<8x32xf32>,
    %76 = vector.extract_strided_slice %73 {offsets = [0, 32], sizes = [8, 32], strides = [1, 1]} : vector<8x64xf32> to vector<8x32xf32>
    %c56 = arith.constant 56 : index
    %c32 = arith.constant 32 : index
    %77 = vector.load %arg9[%c56, %c32] : memref<64x64xf32, #tpu.memory_space<vmem>>, vector<8x32xf32>
    tpu.vector_store %arg9[%c56, %c32], %76 {strides = array<i32>} : memref<64x64xf32, #tpu.memory_space<vmem>>, vector<8x32xf32>,
    %78 = arith.truncf %73 : vector<8x64xf32> to vector<8x64xbf16>
    %cst_17 = arith.constant dense<0.000000e+00> : vector<8x256xf32>
    %79 = tpu.matmul %78, %52, %cst_17 {dimension_numbers = #tpu.dot_dimension_numbers<[1], [0], [0], [1], [0, 0, 1, 1], [], []>} : vector<8x64xbf16>, vector<64x256xbf16>, vector<8x256xf32> -> vector<8x256xf32>
    %80 = arith.addf %79, %33 : vector<8x256xf32>
    %81 = vector.extract_strided_slice %80 {offsets = [0, 0], sizes = [8, 192], strides = [1, 1]} : vector<8x256xf32> to vector<8x192xf32>
    %82 = arith.negf %81 : vector<8x192xf32>
    %83 = math.exp %82 : vector<8x192xf32>
    %cst_18 = arith.constant 1.000000e+00 : f32
    %84 = vector.broadcast %cst_18 : f32 to vector<8x192xf32>
    %85 = arith.addf %84, %83 : vector<8x192xf32>
    %86 = arith.divf %84, %85 : vector<8x192xf32>
    %87 = vector.extract_strided_slice %80 {offsets = [0, 192], sizes = [8, 64], strides = [1, 1]} : vector<8x256xf32> to vector<8x64xf32>
    %88 = math.tanh %87 : vector<8x64xf32>
    %89 = vector.extract_strided_slice %86 {offsets = [0, 64], sizes = [8, 64], strides = [1, 1]} : vector<8x192xf32> to vector<8x64xf32>
    %90 = arith.mulf %89, %70 : vector<8x64xf32>
    %91 = vector.extract_strided_slice %86 {offsets = [0, 0], sizes = [8, 64], strides = [1, 1]} : vector<8x192xf32> to vector<8x64xf32>
    %92 = arith.mulf %91, %88 : vector<8x64xf32>
    %93 = arith.addf %90, %92 : vector<8x64xf32>
    %94 = vector.extract_strided_slice %86 {offsets = [0, 128], sizes = [8, 64], strides = [1, 1]} : vector<8x192xf32> to vector<8x64xf32>
    %95 = math.tanh %93 : vector<8x64xf32>
    %96 = arith.mulf %94, %95 : vector<8x64xf32>
    %97 = vector.extract_strided_slice %96 {offsets = [0, 0], sizes = [8, 32], strides = [1, 1]} : vector<8x64xf32> to vector<8x32xf32>
    %c8 = arith.constant 8 : index
    %c0_19 = arith.constant 0 : index
    %98 = vector.load %arg9[%c8, %c0_19] : memref<64x64xf32, #tpu.memory_space<vmem>>, vector<8x32xf32>
    tpu.vector_store %arg9[%c8, %c0_19], %97 {strides = array<i32>} : memref<64x64xf32, #tpu.memory_space<vmem>>, vector<8x32xf32>,
    %99 = vector.extract_strided_slice %96 {offsets = [0, 32], sizes = [8, 32], strides = [1, 1]} : vector<8x64xf32> to vector<8x32xf32>
    %c48 = arith.constant 48 : index
    %c32_20 = arith.constant 32 : index
    %100 = vector.load %arg9[%c48, %c32_20] : memref<64x64xf32, #tpu.memory_space<vmem>>, vector<8x32xf32>
    tpu.vector_store %arg9[%c48, %c32_20], %99 {strides = array<i32>} : memref<64x64xf32, #tpu.memory_space<vmem>>, vector<8x32xf32>,
    %101 = arith.truncf %96 : vector<8x64xf32> to vector<8x64xbf16>
    %cst_21 = arith.constant dense<0.000000e+00> : vector<8x256xf32>
    %102 = tpu.matmul %101, %52, %cst_21 {dimension_numbers = #tpu.dot_dimension_numbers<[1], [0], [0], [1], [0, 0, 1, 1], [], []>} : vector<8x64xbf16>, vector<64x256xbf16>, vector<8x256xf32> -> vector<8x256xf32>
    %103 = arith.addf %102, %36 : vector<8x256xf32>
    %104 = vector.extract_strided_slice %103 {offsets = [0, 0], sizes = [8, 192], strides = [1, 1]} : vector<8x256xf32> to vector<8x192xf32>
    %105 = arith.negf %104 : vector<8x192xf32>
    %106 = math.exp %105 : vector<8x192xf32>
    %cst_22 = arith.constant 1.000000e+00 : f32
    %107 = vector.broadcast %cst_22 : f32 to vector<8x192xf32>
    %108 = arith.addf %107, %106 : vector<8x192xf32>
    %109 = arith.divf %107, %108 : vector<8x192xf32>
    %110 = vector.extract_strided_slice %103 {offsets = [0, 192], sizes = [8, 64], strides = [1, 1]} : vector<8x256xf32> to vector<8x64xf32>
    %111 = math.tanh %110 : vector<8x64xf32>
    %112 = vector.extract_strided_slice %109 {offsets = [0, 64], sizes = [8, 64], strides = [1, 1]} : vector<8x192xf32> to vector<8x64xf32>
    %113 = arith.mulf %112, %93 : vector<8x64xf32>
    %114 = vector.extract_strided_slice %109 {offsets = [0, 0], sizes = [8, 64], strides = [1, 1]} : vector<8x192xf32> to vector<8x64xf32>
    %115 = arith.mulf %114, %111 : vector<8x64xf32>
    %116 = arith.addf %113, %115 : vector<8x64xf32>
    %117 = vector.extract_strided_slice %109 {offsets = [0, 128], sizes = [8, 64], strides = [1, 1]} : vector<8x192xf32> to vector<8x64xf32>
    %118 = math.tanh %116 : vector<8x64xf32>
    %119 = arith.mulf %117, %118 : vector<8x64xf32>
    %120 = vector.extract_strided_slice %119 {offsets = [0, 0], sizes = [8, 32], strides = [1, 1]} : vector<8x64xf32> to vector<8x32xf32>
    %c16 = arith.constant 16 : index
    %c0_23 = arith.constant 0 : index
    %121 = vector.load %arg9[%c16, %c0_23] : memref<64x64xf32, #tpu.memory_space<vmem>>, vector<8x32xf32>
    tpu.vector_store %arg9[%c16, %c0_23], %120 {strides = array<i32>} : memref<64x64xf32, #tpu.memory_space<vmem>>, vector<8x32xf32>,
    %122 = vector.extract_strided_slice %119 {offsets = [0, 32], sizes = [8, 32], strides = [1, 1]} : vector<8x64xf32> to vector<8x32xf32>
    %c40 = arith.constant 40 : index
    %c32_24 = arith.constant 32 : index
    %123 = vector.load %arg9[%c40, %c32_24] : memref<64x64xf32, #tpu.memory_space<vmem>>, vector<8x32xf32>
    tpu.vector_store %arg9[%c40, %c32_24], %122 {strides = array<i32>} : memref<64x64xf32, #tpu.memory_space<vmem>>, vector<8x32xf32>,
    %124 = arith.truncf %119 : vector<8x64xf32> to vector<8x64xbf16>
    %cst_25 = arith.constant dense<0.000000e+00> : vector<8x256xf32>
    %125 = tpu.matmul %124, %52, %cst_25 {dimension_numbers = #tpu.dot_dimension_numbers<[1], [0], [0], [1], [0, 0, 1, 1], [], []>} : vector<8x64xbf16>, vector<64x256xbf16>, vector<8x256xf32> -> vector<8x256xf32>
    %126 = arith.addf %125, %39 : vector<8x256xf32>
    %127 = vector.extract_strided_slice %126 {offsets = [0, 0], sizes = [8, 192], strides = [1, 1]} : vector<8x256xf32> to vector<8x192xf32>
    %128 = arith.negf %127 : vector<8x192xf32>
    %129 = math.exp %128 : vector<8x192xf32>
    %cst_26 = arith.constant 1.000000e+00 : f32
    %130 = vector.broadcast %cst_26 : f32 to vector<8x192xf32>
    %131 = arith.addf %130, %129 : vector<8x192xf32>
    %132 = arith.divf %130, %131 : vector<8x192xf32>
    %133 = vector.extract_strided_slice %126 {offsets = [0, 192], sizes = [8, 64], strides = [1, 1]} : vector<8x256xf32> to vector<8x64xf32>
    %134 = math.tanh %133 : vector<8x64xf32>
    %135 = vector.extract_strided_slice %132 {offsets = [0, 64], sizes = [8, 64], strides = [1, 1]} : vector<8x192xf32> to vector<8x64xf32>
    %136 = arith.mulf %135, %116 : vector<8x64xf32>
    %137 = vector.extract_strided_slice %132 {offsets = [0, 0], sizes = [8, 64], strides = [1, 1]} : vector<8x192xf32> to vector<8x64xf32>
    %138 = arith.mulf %137, %134 : vector<8x64xf32>
    %139 = arith.addf %136, %138 : vector<8x64xf32>
    %140 = vector.extract_strided_slice %132 {offsets = [0, 128], sizes = [8, 64], strides = [1, 1]} : vector<8x192xf32> to vector<8x64xf32>
    %141 = math.tanh %139 : vector<8x64xf32>
    %142 = arith.mulf %140, %141 : vector<8x64xf32>
    %143 = vector.extract_strided_slice %142 {offsets = [0, 0], sizes = [8, 32], strides = [1, 1]} : vector<8x64xf32> to vector<8x32xf32>
    %c24 = arith.constant 24 : index
    %c0_27 = arith.constant 0 : index
    %144 = vector.load %arg9[%c24, %c0_27] : memref<64x64xf32, #tpu.memory_space<vmem>>, vector<8x32xf32>
    tpu.vector_store %arg9[%c24, %c0_27], %143 {strides = array<i32>} : memref<64x64xf32, #tpu.memory_space<vmem>>, vector<8x32xf32>,
    %145 = vector.extract_strided_slice %142 {offsets = [0, 32], sizes = [8, 32], strides = [1, 1]} : vector<8x64xf32> to vector<8x32xf32>
    %c32_28 = arith.constant 32 : index
    %c32_29 = arith.constant 32 : index
    %146 = vector.load %arg9[%c32_28, %c32_29] : memref<64x64xf32, #tpu.memory_space<vmem>>, vector<8x32xf32>
    tpu.vector_store %arg9[%c32_28, %c32_29], %145 {strides = array<i32>} : memref<64x64xf32, #tpu.memory_space<vmem>>, vector<8x32xf32>,
    %147 = arith.truncf %142 : vector<8x64xf32> to vector<8x64xbf16>
    %cst_30 = arith.constant dense<0.000000e+00> : vector<8x256xf32>
    %148 = tpu.matmul %147, %52, %cst_30 {dimension_numbers = #tpu.dot_dimension_numbers<[1], [0], [0], [1], [0, 0, 1, 1], [], []>} : vector<8x64xbf16>, vector<64x256xbf16>, vector<8x256xf32> -> vector<8x256xf32>
    %149 = arith.addf %148, %42 : vector<8x256xf32>
    %150 = vector.extract_strided_slice %149 {offsets = [0, 0], sizes = [8, 192], strides = [1, 1]} : vector<8x256xf32> to vector<8x192xf32>
    %151 = arith.negf %150 : vector<8x192xf32>
    %152 = math.exp %151 : vector<8x192xf32>
    %cst_31 = arith.constant 1.000000e+00 : f32
    %153 = vector.broadcast %cst_31 : f32 to vector<8x192xf32>
    %154 = arith.addf %153, %152 : vector<8x192xf32>
    %155 = arith.divf %153, %154 : vector<8x192xf32>
    %156 = vector.extract_strided_slice %149 {offsets = [0, 192], sizes = [8, 64], strides = [1, 1]} : vector<8x256xf32> to vector<8x64xf32>
    %157 = math.tanh %156 : vector<8x64xf32>
    %158 = vector.extract_strided_slice %155 {offsets = [0, 64], sizes = [8, 64], strides = [1, 1]} : vector<8x192xf32> to vector<8x64xf32>
    %159 = arith.mulf %158, %139 : vector<8x64xf32>
    %160 = vector.extract_strided_slice %155 {offsets = [0, 0], sizes = [8, 64], strides = [1, 1]} : vector<8x192xf32> to vector<8x64xf32>
    %161 = arith.mulf %160, %157 : vector<8x64xf32>
    %162 = arith.addf %159, %161 : vector<8x64xf32>
    %163 = vector.extract_strided_slice %155 {offsets = [0, 128], sizes = [8, 64], strides = [1, 1]} : vector<8x192xf32> to vector<8x64xf32>
    %164 = math.tanh %162 : vector<8x64xf32>
    %165 = arith.mulf %163, %164 : vector<8x64xf32>
    %166 = vector.extract_strided_slice %165 {offsets = [0, 0], sizes = [8, 32], strides = [1, 1]} : vector<8x64xf32> to vector<8x32xf32>
    %c32_32 = arith.constant 32 : index
    %c0_33 = arith.constant 0 : index
    %167 = vector.load %arg9[%c32_32, %c0_33] : memref<64x64xf32, #tpu.memory_space<vmem>>, vector<8x32xf32>
    tpu.vector_store %arg9[%c32_32, %c0_33], %166 {strides = array<i32>} : memref<64x64xf32, #tpu.memory_space<vmem>>, vector<8x32xf32>,
    %168 = vector.extract_strided_slice %165 {offsets = [0, 32], sizes = [8, 32], strides = [1, 1]} : vector<8x64xf32> to vector<8x32xf32>
    %c24_34 = arith.constant 24 : index
    %c32_35 = arith.constant 32 : index
    %169 = vector.load %arg9[%c24_34, %c32_35] : memref<64x64xf32, #tpu.memory_space<vmem>>, vector<8x32xf32>
    tpu.vector_store %arg9[%c24_34, %c32_35], %168 {strides = array<i32>} : memref<64x64xf32, #tpu.memory_space<vmem>>, vector<8x32xf32>,
    %170 = arith.truncf %165 : vector<8x64xf32> to vector<8x64xbf16>
    %cst_36 = arith.constant dense<0.000000e+00> : vector<8x256xf32>
    %171 = tpu.matmul %170, %52, %cst_36 {dimension_numbers = #tpu.dot_dimension_numbers<[1], [0], [0], [1], [0, 0, 1, 1], [], []>} : vector<8x64xbf16>, vector<64x256xbf16>, vector<8x256xf32> -> vector<8x256xf32>
    %172 = arith.addf %171, %45 : vector<8x256xf32>
    %173 = vector.extract_strided_slice %172 {offsets = [0, 0], sizes = [8, 192], strides = [1, 1]} : vector<8x256xf32> to vector<8x192xf32>
    %174 = arith.negf %173 : vector<8x192xf32>
    %175 = math.exp %174 : vector<8x192xf32>
    %cst_37 = arith.constant 1.000000e+00 : f32
    %176 = vector.broadcast %cst_37 : f32 to vector<8x192xf32>
    %177 = arith.addf %176, %175 : vector<8x192xf32>
    %178 = arith.divf %176, %177 : vector<8x192xf32>
    %179 = vector.extract_strided_slice %172 {offsets = [0, 192], sizes = [8, 64], strides = [1, 1]} : vector<8x256xf32> to vector<8x64xf32>
    %180 = math.tanh %179 : vector<8x64xf32>
    %181 = vector.extract_strided_slice %178 {offsets = [0, 64], sizes = [8, 64], strides = [1, 1]} : vector<8x192xf32> to vector<8x64xf32>
    %182 = arith.mulf %181, %162 : vector<8x64xf32>
    %183 = vector.extract_strided_slice %178 {offsets = [0, 0], sizes = [8, 64], strides = [1, 1]} : vector<8x192xf32> to vector<8x64xf32>
    %184 = arith.mulf %183, %180 : vector<8x64xf32>
    %185 = arith.addf %182, %184 : vector<8x64xf32>
    %186 = vector.extract_strided_slice %178 {offsets = [0, 128], sizes = [8, 64], strides = [1, 1]} : vector<8x192xf32> to vector<8x64xf32>
    %187 = math.tanh %185 : vector<8x64xf32>
    %188 = arith.mulf %186, %187 : vector<8x64xf32>
    %189 = vector.extract_strided_slice %188 {offsets = [0, 0], sizes = [8, 32], strides = [1, 1]} : vector<8x64xf32> to vector<8x32xf32>
    %c40_38 = arith.constant 40 : index
    %c0_39 = arith.constant 0 : index
    %190 = vector.load %arg9[%c40_38, %c0_39] : memref<64x64xf32, #tpu.memory_space<vmem>>, vector<8x32xf32>
    tpu.vector_store %arg9[%c40_38, %c0_39], %189 {strides = array<i32>} : memref<64x64xf32, #tpu.memory_space<vmem>>, vector<8x32xf32>,
    %191 = vector.extract_strided_slice %188 {offsets = [0, 32], sizes = [8, 32], strides = [1, 1]} : vector<8x64xf32> to vector<8x32xf32>
    %c16_40 = arith.constant 16 : index
    %c32_41 = arith.constant 32 : index
    %192 = vector.load %arg9[%c16_40, %c32_41] : memref<64x64xf32, #tpu.memory_space<vmem>>, vector<8x32xf32>
    tpu.vector_store %arg9[%c16_40, %c32_41], %191 {strides = array<i32>} : memref<64x64xf32, #tpu.memory_space<vmem>>, vector<8x32xf32>,
    %193 = arith.truncf %188 : vector<8x64xf32> to vector<8x64xbf16>
    %cst_42 = arith.constant dense<0.000000e+00> : vector<8x256xf32>
    %194 = tpu.matmul %193, %52, %cst_42 {dimension_numbers = #tpu.dot_dimension_numbers<[1], [0], [0], [1], [0, 0, 1, 1], [], []>} : vector<8x64xbf16>, vector<64x256xbf16>, vector<8x256xf32> -> vector<8x256xf32>
    %195 = arith.addf %194, %48 : vector<8x256xf32>
    %196 = vector.extract_strided_slice %195 {offsets = [0, 0], sizes = [8, 192], strides = [1, 1]} : vector<8x256xf32> to vector<8x192xf32>
    %197 = arith.negf %196 : vector<8x192xf32>
    %198 = math.exp %197 : vector<8x192xf32>
    %cst_43 = arith.constant 1.000000e+00 : f32
    %199 = vector.broadcast %cst_43 : f32 to vector<8x192xf32>
    %200 = arith.addf %199, %198 : vector<8x192xf32>
    %201 = arith.divf %199, %200 : vector<8x192xf32>
    %202 = vector.extract_strided_slice %195 {offsets = [0, 192], sizes = [8, 64], strides = [1, 1]} : vector<8x256xf32> to vector<8x64xf32>
    %203 = math.tanh %202 : vector<8x64xf32>
    %204 = vector.extract_strided_slice %201 {offsets = [0, 64], sizes = [8, 64], strides = [1, 1]} : vector<8x192xf32> to vector<8x64xf32>
    %205 = arith.mulf %204, %185 : vector<8x64xf32>
    %206 = vector.extract_strided_slice %201 {offsets = [0, 0], sizes = [8, 64], strides = [1, 1]} : vector<8x192xf32> to vector<8x64xf32>
    %207 = arith.mulf %206, %203 : vector<8x64xf32>
    %208 = arith.addf %205, %207 : vector<8x64xf32>
    %209 = vector.extract_strided_slice %201 {offsets = [0, 128], sizes = [8, 64], strides = [1, 1]} : vector<8x192xf32> to vector<8x64xf32>
    %210 = math.tanh %208 : vector<8x64xf32>
    %211 = arith.mulf %209, %210 : vector<8x64xf32>
    %212 = vector.extract_strided_slice %211 {offsets = [0, 0], sizes = [8, 32], strides = [1, 1]} : vector<8x64xf32> to vector<8x32xf32>
    %c48_44 = arith.constant 48 : index
    %c0_45 = arith.constant 0 : index
    %213 = vector.load %arg9[%c48_44, %c0_45] : memref<64x64xf32, #tpu.memory_space<vmem>>, vector<8x32xf32>
    tpu.vector_store %arg9[%c48_44, %c0_45], %212 {strides = array<i32>} : memref<64x64xf32, #tpu.memory_space<vmem>>, vector<8x32xf32>,
    %214 = vector.extract_strided_slice %211 {offsets = [0, 32], sizes = [8, 32], strides = [1, 1]} : vector<8x64xf32> to vector<8x32xf32>
    %c8_46 = arith.constant 8 : index
    %c32_47 = arith.constant 32 : index
    %215 = vector.load %arg9[%c8_46, %c32_47] : memref<64x64xf32, #tpu.memory_space<vmem>>, vector<8x32xf32>
    tpu.vector_store %arg9[%c8_46, %c32_47], %214 {strides = array<i32>} : memref<64x64xf32, #tpu.memory_space<vmem>>, vector<8x32xf32>,
    %216 = arith.truncf %211 : vector<8x64xf32> to vector<8x64xbf16>
    %cst_48 = arith.constant dense<0.000000e+00> : vector<8x256xf32>
    %217 = tpu.matmul %216, %52, %cst_48 {dimension_numbers = #tpu.dot_dimension_numbers<[1], [0], [0], [1], [0, 0, 1, 1], [], []>} : vector<8x64xbf16>, vector<64x256xbf16>, vector<8x256xf32> -> vector<8x256xf32>
    %218 = arith.addf %217, %51 : vector<8x256xf32>
    %219 = vector.extract_strided_slice %218 {offsets = [0, 0], sizes = [8, 192], strides = [1, 1]} : vector<8x256xf32> to vector<8x192xf32>
    %220 = arith.negf %219 : vector<8x192xf32>
    %221 = math.exp %220 : vector<8x192xf32>
    %cst_49 = arith.constant 1.000000e+00 : f32
    %222 = vector.broadcast %cst_49 : f32 to vector<8x192xf32>
    %223 = arith.addf %222, %221 : vector<8x192xf32>
    %224 = arith.divf %222, %223 : vector<8x192xf32>
    %225 = vector.extract_strided_slice %218 {offsets = [0, 192], sizes = [8, 64], strides = [1, 1]} : vector<8x256xf32> to vector<8x64xf32>
    %226 = math.tanh %225 : vector<8x64xf32>
    %227 = vector.extract_strided_slice %224 {offsets = [0, 64], sizes = [8, 64], strides = [1, 1]} : vector<8x192xf32> to vector<8x64xf32>
    %228 = arith.mulf %227, %208 : vector<8x64xf32>
    %229 = vector.extract_strided_slice %224 {offsets = [0, 0], sizes = [8, 64], strides = [1, 1]} : vector<8x192xf32> to vector<8x64xf32>
    %230 = arith.mulf %229, %226 : vector<8x64xf32>
    %231 = arith.addf %228, %230 : vector<8x64xf32>
    %232 = vector.extract_strided_slice %224 {offsets = [0, 128], sizes = [8, 64], strides = [1, 1]} : vector<8x192xf32> to vector<8x64xf32>
    %233 = math.tanh %231 : vector<8x64xf32>
    %234 = arith.mulf %232, %233 : vector<8x64xf32>
    %235 = vector.extract_strided_slice %234 {offsets = [0, 0], sizes = [8, 32], strides = [1, 1]} : vector<8x64xf32> to vector<8x32xf32>
    %c56_50 = arith.constant 56 : index
    %c0_51 = arith.constant 0 : index
    %236 = vector.load %arg9[%c56_50, %c0_51] : memref<64x64xf32, #tpu.memory_space<vmem>>, vector<8x32xf32>
    tpu.vector_store %arg9[%c56_50, %c0_51], %235 {strides = array<i32>} : memref<64x64xf32, #tpu.memory_space<vmem>>, vector<8x32xf32>,
    %237 = vector.extract_strided_slice %234 {offsets = [0, 32], sizes = [8, 32], strides = [1, 1]} : vector<8x64xf32> to vector<8x32xf32>
    %c0_52 = arith.constant 0 : index
    %c32_53 = arith.constant 32 : index
    %238 = vector.load %arg9[%c0_52, %c32_53] : memref<64x64xf32, #tpu.memory_space<vmem>>, vector<8x32xf32>
    tpu.vector_store %arg9[%c0_52, %c32_53], %237 {strides = array<i32>} : memref<64x64xf32, #tpu.memory_space<vmem>>, vector<8x32xf32>,
    %c0_54 = arith.constant 0 : index
    %c0_55 = arith.constant 0 : index
    %239 = vector.load %arg9[%c0_54, %c0_55] : memref<64x64xf32, #tpu.memory_space<vmem>>, vector<64x64xf32>
    %240 = arith.truncf %239 : vector<64x64xf32> to vector<64x64xbf16>
    %c0_56 = arith.constant 0 : index
    %c0_57 = arith.constant 0 : index
    %241 = vector.load %arg5[%c0_56, %c0_57] : memref<64x64xbf16, #tpu.memory_space<vmem>>, vector<64x64xbf16>
    %cst_58 = arith.constant dense<0.000000e+00> : vector<64x64xf32>
    %242 = tpu.matmul %240, %241, %cst_58 {dimension_numbers = #tpu.dot_dimension_numbers<[1], [0], [0], [1], [0, 0, 1, 1], [], []>} : vector<64x64xbf16>, vector<64x64xbf16>, vector<64x64xf32> -> vector<64x64xf32>
    %243 = arith.addf %242, %8 : vector<64x64xf32>
    %244 = math.tanh %243 : vector<64x64xf32>
    %245 = vector.extract_strided_slice %244 {offsets = [0, 0], sizes = [8, 64], strides = [1, 1]} : vector<64x64xf32> to vector<8x64xf32>
    %246 = vector.extract_strided_slice %244 {offsets = [8, 0], sizes = [8, 64], strides = [1, 1]} : vector<64x64xf32> to vector<8x64xf32>
    %247 = arith.maximumf %245, %246 : vector<8x64xf32>
    %248 = vector.extract_strided_slice %244 {offsets = [16, 0], sizes = [8, 64], strides = [1, 1]} : vector<64x64xf32> to vector<8x64xf32>
    %249 = arith.maximumf %247, %248 : vector<8x64xf32>
    %250 = vector.extract_strided_slice %244 {offsets = [24, 0], sizes = [8, 64], strides = [1, 1]} : vector<64x64xf32> to vector<8x64xf32>
    %251 = arith.maximumf %249, %250 : vector<8x64xf32>
    %252 = vector.extract_strided_slice %244 {offsets = [32, 0], sizes = [8, 64], strides = [1, 1]} : vector<64x64xf32> to vector<8x64xf32>
    %253 = arith.maximumf %251, %252 : vector<8x64xf32>
    %254 = vector.extract_strided_slice %244 {offsets = [40, 0], sizes = [8, 64], strides = [1, 1]} : vector<64x64xf32> to vector<8x64xf32>
    %255 = arith.maximumf %253, %254 : vector<8x64xf32>
    %256 = vector.extract_strided_slice %244 {offsets = [48, 0], sizes = [8, 64], strides = [1, 1]} : vector<64x64xf32> to vector<8x64xf32>
    %257 = arith.maximumf %255, %256 : vector<8x64xf32>
    %258 = vector.extract_strided_slice %244 {offsets = [56, 0], sizes = [8, 64], strides = [1, 1]} : vector<64x64xf32> to vector<8x64xf32>
    %259 = arith.maximumf %257, %258 : vector<8x64xf32>
    %260 = arith.truncf %259 : vector<8x64xf32> to vector<8x64xbf16>
    %c0_59 = arith.constant 0 : index
    %c0_60 = arith.constant 0 : index
    %261 = vector.load %arg6[%c0_59, %c0_60] : memref<64x128xbf16, #tpu.memory_space<vmem>>, vector<64x128xbf16>
    %cst_61 = arith.constant dense<0.000000e+00> : vector<8x128xf32>
    %262 = tpu.matmul %260, %261, %cst_61 {dimension_numbers = #tpu.dot_dimension_numbers<[1], [0], [0], [1], [0, 0, 1, 1], [], []>} : vector<8x64xbf16>, vector<64x128xbf16>, vector<8x128xf32> -> vector<8x128xf32>
    %c0_62 = arith.constant 0 : index
    %c0_63 = arith.constant 0 : index
    %263 = vector.load %arg7[%c0_62, %c0_63] : memref<1x128xf32, #tpu.memory_space<vmem>>, vector<1x128xf32>
    %264 = vector.broadcast %263 : vector<1x128xf32> to vector<8x128xf32>
    %265 = arith.addf %262, %264 : vector<8x128xf32>
    %c0_64 = arith.constant 0 : index
    %c0_65 = arith.constant 0 : index
    %266 = vector.load %arg8[%c0_64, %c0_65] : memref<8x128xf32, #tpu.memory_space<vmem>>, vector<8x128xf32>
    tpu.vector_store %arg8[%c0_64, %c0_65], %265 {strides = array<i32>} : memref<8x128xf32, #tpu.memory_space<vmem>>, vector<8x128xf32>,
    return
  }
  func.func @transform_0(%arg0: i32) -> (i32, i32, i32) {
    %c0_i32 = arith.constant 0 : i32
    %c0_i32_0 = arith.constant 0 : i32
    %c0_i32_1 = arith.constant 0 : i32
    return %arg0, %c0_i32, %c0_i32_0 : i32, i32, i32
  }
  func.func @transform_1(%arg0: i32) -> (i32, i32) {
    %c0_i32 = arith.constant 0 : i32
    %c0_i32_0 = arith.constant 0 : i32
    %c0_i32_1 = arith.constant 0 : i32
    return %c0_i32, %c0_i32_0 : i32, i32
  }
  func.func @transform_2(%arg0: i32) -> (i32, i32) {
    %c0_i32 = arith.constant 0 : i32
    %c0_i32_0 = arith.constant 0 : i32
    %c0_i32_1 = arith.constant 0 : i32
    return %c0_i32, %c0_i32_0 : i32, i32
  }
  func.func @transform_3(%arg0: i32) -> (i32, i32) {
    %c0_i32 = arith.constant 0 : i32
    %c0_i32_0 = arith.constant 0 : i32
    %c0_i32_1 = arith.constant 0 : i32
    return %c0_i32, %c0_i32_0 : i32, i32
  }
  func.func @transform_4(%arg0: i32) -> (i32, i32) {
    %c0_i32 = arith.constant 0 : i32
    %c0_i32_0 = arith.constant 0 : i32
    %c0_i32_1 = arith.constant 0 : i32
    return %c0_i32, %c0_i32_0 : i32, i32
  }
  func.func @transform_5(%arg0: i32) -> (i32, i32) {
    %c0_i32 = arith.constant 0 : i32
    %c0_i32_0 = arith.constant 0 : i32
    %c0_i32_1 = arith.constant 0 : i32
    return %c0_i32, %c0_i32_0 : i32, i32
  }
  func.func @transform_6(%arg0: i32) -> (i32, i32) {
    %c0_i32 = arith.constant 0 : i32
    %c0_i32_0 = arith.constant 0 : i32
    %c0_i32_1 = arith.constant 0 : i32
    return %c0_i32, %c0_i32_0 : i32, i32
  }
  func.func @transform_7(%arg0: i32) -> (i32, i32) {
    %c0_i32 = arith.constant 0 : i32
    %c0_i32_0 = arith.constant 0 : i32
    return %arg0, %c0_i32 : i32, i32
  }
}

</mosaic_0001>

<llo_original>
// kernel: textrcnn_forward.1
$region0: #{textrcnn_forward.1}
  #allocation0 [shape = 'u32[]', space=smem, size = 0x4, offset = 0x4, fixed_abs, tag = 'smem constant byte address 0x4 - core index']
  #allocation1 [shape = 'u32[72,128]{1,0:T(1,128)}', space=vmem, size = 0x9000, scoped, tag = 'internal scratch']
  #allocation2 [shape = 'f32[64,64]{1,0:T(8,128)}', space=vmem, size = 0x8000, scoped, tag = 'scratch operand']
  %s0 = inlined_call_operand.vmem [shape: bf16[1,64,32], index: 0, kind: input, shape index: {}]
  %s1 = inlined_call_operand.vmem [shape: bf16[32,320], index: 1, kind: input, shape index: {}]
  %s2 = inlined_call_operand.vmem [shape: f32[1,320], index: 2, kind: input, shape index: {}]
  %s3 = inlined_call_operand.vmem [shape: bf16[64,256], index: 3, kind: input, shape index: {}]
  %s4 = inlined_call_operand.vmem [shape: bf16[64,64], index: 4, kind: input, shape index: {}]
  %s5 = inlined_call_operand.vmem [shape: bf16[64,128], index: 5, kind: input, shape index: {}]
  %s6 = inlined_call_operand.vmem [shape: f32[1,128], index: 6, kind: input, shape index: {}]
  %s7 = inlined_call_operand.vmem [shape: f32[8,128], index: 7, kind: output, shape index: {}]
  %s8 = sld [smem:[#allocation0]]
  $region38: #{textrcnn_forward.1} parent=0
    _
  %s10 = ssub.s32 1, %s8
  %s11 = scalar_select 0, %s10, %s8
  // Predicated region
  $region2: #{textrcnn_forward.1} parent=0 // pred_check
    _
  $region3: #{textrcnn_forward.1} parent=0 // pred_check_branch
    %13 = sbr.rel (0) target = $region5
  $region4: #{textrcnn_forward.1} parent=0 // pred_region
    _
  $region5: #{textrcnn_forward.1} parent=0 // pred_fallthru
    _
  // Predicated region
  $region6: #{textrcnn_forward.1} parent=0 // pred_check
    _
  $region7: #{textrcnn_forward.1} parent=0 // pred_check_branch
    %15 = sbr.rel (0) target = $region9
  $region8: #{textrcnn_forward.1} parent=0 // pred_region
    _
  $region9: #{textrcnn_forward.1} parent=0 // pred_fallthru
    _
  // Predicated region
  $region10: #{textrcnn_forward.1} parent=0 // pred_check
    _
  $region11: #{textrcnn_forward.1} parent=0 // pred_check_branch
    %17 = sbr.rel (0) target = $region13
  $region12: #{textrcnn_forward.1} parent=0 // pred_region
    _
  $region13: #{textrcnn_forward.1} parent=0 // pred_fallthru
    _
  // Predicated region
  $region14: #{textrcnn_forward.1} parent=0 // pred_check
    _
  $region15: #{textrcnn_forward.1} parent=0 // pred_check_branch
    %19 = sbr.rel (0) target = $region17
  $region16: #{textrcnn_forward.1} parent=0 // pred_region
    _
  $region17: #{textrcnn_forward.1} parent=0 // pred_fallthru
    _
  // Predicated region
  $region18: #{textrcnn_forward.1} parent=0 // pred_check
    _
  $region19: #{textrcnn_forward.1} parent=0 // pred_check_branch
    %21 = sbr.rel (0) target = $region21
  $region20: #{textrcnn_forward.1} parent=0 // pred_region
    _
  $region21: #{textrcnn_forward.1} parent=0 // pred_fallthru
    _
  // Predicated region
  $region22: #{textrcnn_forward.1} parent=0 // pred_check
    _
  $region23: #{textrcnn_forward.1} parent=0 // pred_check_branch
    %23 = sbr.rel (0) target = $region25
  $region24: #{textrcnn_forward.1} parent=0 // pred_region
    _
  $region25: #{textrcnn_forward.1} parent=0 // pred_fallthru
    _
  // Predicated region
  $region26: #{textrcnn_forward.1} parent=0 // pred_check
    _
  $region27: #{textrcnn_forward.1} parent=0 // pred_check_branch
    %25 = sbr.rel (0) target = $region29
  $region28: #{textrcnn_forward.1} parent=0 // pred_region
    _
  $region29: #{textrcnn_forward.1} parent=0 // pred_fallthru
    _
  %v27 = vld [vmem:[%s0] sm:$0xf]
  %v28 = vld [vmem:[%s0 + $0x4] sm:$0xf]
  %v29 = vld [vmem:[%s0 + $0x8] sm:$0xf]
  %v30 = vld [vmem:[%s0 + $0xc] sm:$0xf]
  %v31 = vld [vmem:[%s0 + $0x10] sm:$0xf]
  %v32 = vld [vmem:[%s0 + $0x14] sm:$0xf]
  %v33 = vld [vmem:[%s0 + $0x18] sm:$0xf]
  %v34 = vld [vmem:[%s0 + $0x1c] sm:$0xf]
  %v35 = vld [vmem:[%s1] sm:$0xff]
  %v36 = vld [vmem:[%s1 + $0x8] sm:$0xf]
  %v37 = vld [vmem:[%s1 + $0xc] sm:$0xff]
  %v38 = vld [vmem:[%s1 + $0x14] sm:$0xf]
  %v39 = vld [vmem:[%s1 + $0x18] sm:$0xff]
  %v40 = vld [vmem:[%s1 + $0x20] sm:$0xf]
  %v41 = vld [vmem:[%s1 + $0x24] sm:$0xff]
  %v42 = vld [vmem:[%s1 + $0x2c] sm:$0xf]
  %v43 = vld [vmem:[%s2] sm:$0x7]
  %v45 = vperm.slane %v43, 0
  %v46 = vperm.slane %v43, 1
  %v47 = vperm.slane %v43, 2
  %v59 = vunpack.c.l.b16 %v27
  %v60 = vunpack.c.l.b16 %v28
  %v61 = vunpack.c.l.b16 %v29
  %v62 = vunpack.c.l.b16 %v30
  %v63 = vunpack.c.l.b16 %v31
  %v64 = vunpack.c.l.b16 %v32
  %v65 = vunpack.c.l.b16 %v33
  %v66 = vunpack.c.l.b16 %v34
  %v67 = vpack.c.b16 %v60, %v59
  %v68 = vpack.c.b16 %v62, %v61
  %v69 = vpack.c.b16 %v64, %v63
  %v70 = vpack.c.b16 %v66, %v65
  %v79 = vunpack.c.l.b16 %v35
  %v80 = vunpack.c.h.b16 %v35
  %v81 = vunpack.c.l.b16 %v36
  %v82 = vunpack.c.l.b16 %v37
  %v83 = vunpack.c.h.b16 %v37
  %v84 = vunpack.c.l.b16 %v38
  %v85 = vunpack.c.l.b16 %v39
  %v86 = vunpack.c.h.b16 %v39
  %v87 = vunpack.c.l.b16 %v40
  %v88 = vunpack.c.l.b16 %v41
  %v89 = vunpack.c.h.b16 %v41
  %v90 = vunpack.c.l.b16 %v42
  %v91 = vpack.c.b16 %v82, %v79
  %v92 = vpack.c.b16 %v83, %v80
  %v93 = vpack.c.b16 %v84, %v81
  %v94 = vpack.c.b16 %v88, %v85
  %v95 = vpack.c.b16 %v89, %v86
  %v96 = vpack.c.b16 %v90, %v87
  %vm103 = vcmask 261120
  %v105 = vsel %vm103, %v67, 0
  %v108 = vsel %vm103, %v68, 0
  %v111 = vsel %vm103, %v69, 0
  %v114 = vsel %vm103, %v70, 0
  %116 = vmatpush.bf16.msra.mxu0 0
  %117 = vmatpush.bf16.msra.mxu0 0
  %118 = vmatpush.bf16.msra.mxu0 0
  %119 = vmatpush.bf16.msra.mxu0 0
  %120 = vmatpush.bf16.msra.mxu0 0
  %121 = vmatpush.bf16.msra.mxu0 0
  %122 = vmatpush.bf16.msra.mxu0 %v94
  %123 = vmatpush.bf16.msra.mxu0 %v91
  %124 = vmatmul.bf16.gmra.mxu0 %v105
  %v125 = vpop.f32.mrf.mxu0
  %v126 = vadd.f32 %v45, %v125
  %v127 = vpop.f32.mrf.mxu0
  %v128 = vadd.f32 %v45, %v127
  %129 = vmatmul.bf16.gmra.mxu0 %v108
  %v130 = vpop.f32.mrf.mxu0
  %v131 = vadd.f32 %v45, %v130
  %v132 = vpop.f32.mrf.mxu0
  %v133 = vadd.f32 %v45, %v132
  %134 = vmatmul.bf16.gmra.mxu0 %v111
  %v135 = vpop.f32.mrf.mxu0
  %v136 = vadd.f32 %v45, %v135
  %v137 = vpop.f32.mrf.mxu0
  %v138 = vadd.f32 %v45, %v137
  %139 = vmatmul.bf16.gmra.mxu0 %v114
  %v140 = vpop.f32.mrf.mxu0
  %v141 = vadd.f32 %v45, %v140
  %v142 = vpop.f32.mrf.mxu0
  %v143 = vadd.f32 %v45, %v142
  %144 = vdwg.mxu0
  %145 = vmatpush.bf16.msra.mxu0 0
  %146 = vmatpush.bf16.msra.mxu0 0
  %147 = vmatpush.bf16.msra.mxu0 0
  %148 = vmatpush.bf16.msra.mxu0 0
  %149 = vmatpush.bf16.msra.mxu0 0
  %150 = vmatpush.bf16.msra.mxu0 0
  %151 = vmatpush.bf16.msra.mxu0 %v95
  %152 = vmatpush.bf16.msra.mxu0 %v92
  %153 = vmatmul.bf16.gmra.mxu0 %v105
  %v154 = vpop.f32.mrf.mxu0
  %v155 = vadd.f32 %v46, %v154
  %v156 = vpop.f32.mrf.mxu0
  %v157 = vadd.f32 %v46, %v156
  %158 = vmatmul.bf16.gmra.mxu0 %v108
  %v159 = vpop.f32.mrf.mxu0
  %v160 = vadd.f32 %v46, %v159
  %v161 = vpop.f32.mrf.mxu0
  %v162 = vadd.f32 %v46, %v161
  %163 = vmatmul.bf16.gmra.mxu0 %v111
  %v164 = vpop.f32.mrf.mxu0
  %v165 = vadd.f32 %v46, %v164
  %v166 = vpop.f32.mrf.mxu0
  %v167 = vadd.f32 %v46, %v166
  %168 = vmatmul.bf16.gmra.mxu0 %v114
  %v169 = vpop.f32.mrf.mxu0
  %v170 = vadd.f32 %v46, %v169
  %v171 = vpop.f32.mrf.mxu0
  %v172 = vadd.f32 %v46, %v171
  %173 = vdwg.mxu0
  %174 = vmatpush.bf16.msra.mxu0 0
  %175 = vmatpush.bf16.msra.mxu0 0
  %176 = vmatpush.bf16.msra.mxu0 0
  %177 = vmatpush.bf16.msra.mxu0 0
  %178 = vmatpush.bf16.msra.mxu0 0
  %179 = vmatpush.bf16.msra.mxu0 0
  %180 = vmatpush.bf16.msra.mxu0 %v96
  %181 = vmatpush.bf16.msra.mxu0 %v93
  %182 = vmatmul.bf16.gmra.mxu0 %v105
  %v183 = vpop.f32.mrf.mxu0
  %v184 = vadd.f32 %v47, %v183
  %v185 = vpop.f32.mrf.mxu0
  %v186 = vadd.f32 %v47, %v185
  %187 = vmatmul.bf16.gmra.mxu0 %v108
  %v188 = vpop.f32.mrf.mxu0
  %v189 = vadd.f32 %v47, %v188
  %v190 = vpop.f32.mrf.mxu0
  %v191 = vadd.f32 %v47, %v190
  %192 = vmatmul.bf16.gmra.mxu0 %v111
  %v193 = vpop.f32.mrf.mxu0
  %v194 = vadd.f32 %v47, %v193
  %v195 = vpop.f32.mrf.mxu0
  %v196 = vadd.f32 %v47, %v195
  %197 = vmatmul.bf16.gmra.mxu0 %v114
  %v198 = vpop.f32.mrf.mxu0
  %v199 = vadd.f32 %v47, %v198
  %v200 = vpop.f32.mrf.mxu0
  %v201 = vadd.f32 %v47, %v200
  %202 = vdwg.mxu0
  %v203 = vlaneseq
  %v204 = vand.u32 %v203, 127
  %v205 = vadd.s32 %v204, 128
  %vm206 = vcmp.lt.s32.totalorder %v204, 0
  %v207 = vsub.s32 0, %v204
  %v208 = vsel %vm206, %v207, %v204
  %v209 = vshrl.u32 %v208, 6
  %v210 = vand.u32 %v208, 63
  %v211 = vsub.s32 0, %v210
  %v212 = vsel %vm206, %v211, %v210
  %vm213 = vcmp.lt.s32.totalorder %v205, 0
  %v214 = vsub.s32 0, %v205
  %v215 = vsel %vm213, %v214, %v205
  %v216 = vshrl.u32 %v215, 6
  %v217 = vand.u32 %v215, 63
  %v218 = vsub.s32 0, %v217
  %v219 = vsel %vm213, %v218, %v217
  %vm220 = vcmp.ne.s32.totalorder %v212, 0
  %vm221 = vcmp.ne.s32.totalorder %v219, 0
  %vm222 = vcmp.lt.s32.totalorder %v212, 0
  %vm223 = vcmp.lt.s32.totalorder %v219, 0
  %vm224 = vmand %vm222, %vm220
  %vm225 = vmand %vm223, %vm221
  %v226 = vadd.s32 %v212, 64
  %v227 = vadd.s32 %v219, 64
  %v228 = vsel %vm224, %v226, %v212
  %v229 = vsel %vm225, %v227, %v219
  %vm230 = vcmp.lt.s32.totalorder %v228, 32
  %vm231 = vcmp.lt.s32.totalorder %v229, 32
  %v232 = vsel %vm230, %v126, %v143
  %v233 = vsel %vm231, %v155, %v172
  %v234 = vsel %vm230, %v128, %v141
  %v235 = vsel %vm231, %v157, %v170
  %v236 = vsel %vm230, %v131, %v138
  %v237 = vsel %vm231, %v160, %v167
  %v238 = vsel %vm230, %v133, %v136
  %v239 = vsel %vm231, %v162, %v165
  %v240 = vsel %vm230, %v136, %v133
  %v241 = vsel %vm231, %v165, %v162
  %v242 = vsel %vm230, %v138, %v131
  %v243 = vsel %vm231, %v167, %v160
  %v244 = vsel %vm230, %v141, %v128
  %v245 = vsel %vm231, %v170, %v157
  %v246 = vsel %vm230, %v143, %v126
  %v247 = vsel %vm231, %v172, %v155
  %v248 = vld [vmem:[%s3] sm:$0xff]
  %v249 = vld [vmem:[%s3 + $0x8] sm:$0xff]
  %v250 = vld [vmem:[%s3 + $0x10] sm:$0xff]
  %v251 = vld [vmem:[%s3 + $0x18] sm:$0xff]
  %v252 = vld [vmem:[%s3 + $0x20] sm:$0xff]
  %v253 = vld [vmem:[%s3 + $0x28] sm:$0xff]
  %v254 = vld [vmem:[%s3 + $0x30] sm:$0xff]
  %v255 = vld [vmem:[%s3 + $0x38] sm:$0xff]
  %v264 = vunpack.c.l.b16 %v248
  %v265 = vunpack.c.h.b16 %v248
  %v266 = vunpack.c.l.b16 %v249
  %v267 = vunpack.c.h.b16 %v249
  %v268 = vunpack.c.l.b16 %v250
  %v269 = vunpack.c.h.b16 %v250
  %v270 = vunpack.c.l.b16 %v251
  %v271 = vunpack.c.h.b16 %v251
  %v272 = vunpack.c.l.b16 %v252
  %v273 = vunpack.c.h.b16 %v252
  %v274 = vunpack.c.l.b16 %v253
  %v275 = vunpack.c.h.b16 %v253
  %v276 = vunpack.c.l.b16 %v254
  %v277 = vunpack.c.h.b16 %v254
  %v278 = vunpack.c.l.b16 %v255
  %v279 = vunpack.c.h.b16 %v255
  %v280 = vpack.c.b16 %v266, %v264
  %v281 = vpack.c.b16 %v267, %v265
  %v282 = vpack.c.b16 %v270, %v268
  %v283 = vpack.c.b16 %v271, %v269
  %v284 = vpack.c.b16 %v274, %v272
  %v285 = vpack.c.b16 %v275, %v273
  %v286 = vpack.c.b16 %v278, %v276
  %v287 = vpack.c.b16 %v279, %v277
  %vm296 = vcmask 523264
  %v298 = vsel %vm296, 0, 0
  %300 = vmatpush.bf16.msra.mxu0 0
  %301 = vmatpush.bf16.msra.mxu0 0
  %302 = vmatpush.bf16.msra.mxu0 0
  %303 = vmatpush.bf16.msra.mxu0 0
  %304 = vmatpush.bf16.msra.mxu0 %v286
  %305 = vmatpush.bf16.msra.mxu0 %v284
  %306 = vmatpush.bf16.msra.mxu0 %v282
  %307 = vmatpush.bf16.msra.mxu0 %v280
  %308 = vmatmul.bf16.gmra.mxu0 %v298
  %v309 = vpop.f32.mrf.mxu0
  %v310 = vadd.f32 %v232, %v309
  %v311 = vpop.f32.mrf.mxu0
  %312 = vdwg.mxu0
  %313 = vmatpush.bf16.msra.mxu0 0
  %314 = vmatpush.bf16.msra.mxu0 0
  %315 = vmatpush.bf16.msra.mxu0 0
  %316 = vmatpush.bf16.msra.mxu0 0
  %317 = vmatpush.bf16.msra.mxu0 %v287
  %318 = vmatpush.bf16.msra.mxu0 %v285
  %319 = vmatpush.bf16.msra.mxu0 %v283
  %320 = vmatpush.bf16.msra.mxu0 %v281
  %321 = vmatmul.bf16.gmra.mxu0 %v298
  %v322 = vpop.f32.mrf.mxu0
  %v323 = vadd.f32 %v233, %v322
  %v324 = vpop.f32.mrf.mxu0
  %325 = vdwg.mxu0
  %v326 = vxor.u32 %v310, 2147483648
  %v327 = vxor.u32 %v323, 2147483648
  %v328 = vmul.f32 %v326, 1.442695
  %v329 = vpow.pop %v328
  %v330 = vmul.f32 %v327, 1.442695
  %v331 = vpow.pop %v330
  %v332 = vadd.f32 %v329, 1.0
  %v333 = vadd.f32 %v331, 1.0
  %v334 = vrcp.pop %v332
  %v335 = vmul.f32 %v332, %v334
  %v336 = vsub.f32 1.0, %v335
  %v337 = vmul.f32 %v334, %v336
  %v338 = vadd.f32 %v334, %v337
  %vm339 = vweird.f32 %v332
  %vm340 = vweird.f32 %v334
  %vm341 = vmor %vm339, %vm340
  %v342 = vsel %vm341, %v334, %v338
  %v343 = vand.u32 2147483647, %v332
  %vm344 = vcmp.eq.f32.partialorder %v343, 8.507059e+37
  %v345 = vand.u32 %v332, 2147483648
  %v346 = vor.u32 1.1754944e-38, %v345
  %v347 = vsel %vm344, %v346, %v342
  %v348 = vmul.f32 1.0, %v347
  %v349 = vrcp.pop %v333
  %v350 = vmul.f32 %v333, %v349
  %v351 = vsub.f32 1.0, %v350
  %v352 = vmul.f32 %v349, %v351
  %v353 = vadd.f32 %v349, %v352
  %vm354 = vweird.f32 %v333
  %vm355 = vweird.f32 %v349
  %vm356 = vmor %vm354, %vm355
  %v357 = vsel %vm356, %v349, %v353
  %v358 = vand.u32 2147483647, %v333
  %vm359 = vcmp.eq.f32.partialorder %v358, 8.507059e+37
  %v360 = vand.u32 %v333, 2147483648
  %v361 = vor.u32 1.1754944e-38, %v360
  %v362 = vsel %vm359, %v361, %v357
  %v363 = vmul.f32 1.0, %v362
  %v364 = vtanh.pop %v323
  %v365 = vmul.f32 %v348, 0.0
  %367 = vrot.lane.b32.xlu0 %v364, 64
  %v368 = vpop.permute.xlu0 %367
  %v370 = vmul.f32 %v348, %v368
  %372 = vrot.lane.b32.xlu0 %v370, 64
  %v373 = vpop.permute.xlu0 %372
  %v375 = vadd.f32 %v365, %v373
  %v376 = vtanh.pop %v375
  %378 = vrot.lane.b32.xlu0 %v376, 64
  %v379 = vpop.permute.xlu0 %378
  %v381 = vmul.f32 %v363, %v379
  %382 = vst.msk [vmem:[#allocation2] sm:$0xff] %vm103, %v381
  %vm383 = vcmask 523520
  %384 = vst.msk [vmem:[#allocation2 + $0x38] sm:$0xff] %vm383, %v381
  %v385 = vpack.c.bf16 %v381, %v381
  %v387 = vsel %vm296, %v385, 0
  %389 = vmatpush.bf16.msra.mxu0 0
  %390 = vmatpush.bf16.msra.mxu0 0
  %391 = vmatpush.bf16.msra.mxu0 0
  %392 = vmatpush.bf16.msra.mxu0 0
  %393 = vmatpush.bf16.msra.mxu0 %v286
  %394 = vmatpush.bf16.msra.mxu0 %v284
  %395 = vmatpush.bf16.msra.mxu0 %v282
  %396 = vmatpush.bf16.msra.mxu0 %v280
  %397 = vmatmul.bf16.gmra.mxu0 %v387
  %v398 = vpop.f32.mrf.mxu0
  %v399 = vadd.f32 %v234, %v398
  %v400 = vpop.f32.mrf.mxu0
  %401 = vdwg.mxu0
  %402 = vmatpush.bf16.msra.mxu0 0
  %403 = vmatpush.bf16.msra.mxu0 0
  %404 = vmatpush.bf16.msra.mxu0 0
  %405 = vmatpush.bf16.msra.mxu0 0
  %406 = vmatpush.bf16.msra.mxu0 %v287
  %407 = vmatpush.bf16.msra.mxu0 %v285
  %408 = vmatpush.bf16.msra.mxu0 %v283
  %409 = vmatpush.bf16.msra.mxu0 %v281
  %410 = vmatmul.bf16.gmra.mxu0 %v387
  %v411 = vpop.f32.mrf.mxu0
  %v412 = vadd.f32 %v235, %v411
  %v413 = vpop.f32.mrf.mxu0
  %414 = vdwg.mxu0
  %v415 = vxor.u32 %v399, 2147483648
  %v416 = vxor.u32 %v412, 2147483648
  %v417 = vmul.f32 %v415, 1.442695
  %v418 = vpow.pop %v417
  %v419 = vmul.f32 %v416, 1.442695
  %v420 = vpow.pop %v419
  %v421 = vadd.f32 %v418, 1.0
  %v422 = vadd.f32 %v420, 1.0
  %v423 = vrcp.pop %v421
  %v424 = vmul.f32 %v421, %v423
  %v425 = vsub.f32 1.0, %v424
  %v426 = vmul.f32 %v423, %v425
  %v427 = vadd.f32 %v423, %v426
  %vm428 = vweird.f32 %v421
  %vm429 = vweird.f32 %v423
  %vm430 = vmor %vm428, %vm429
  %v431 = vsel %vm430, %v423, %v427
  %v432 = vand.u32 2147483647, %v421
  %vm433 = vcmp.eq.f32.partialorder %v432, 8.507059e+37
  %v434 = vand.u32 %v421, 2147483648
  %v435 = vor.u32 1.1754944e-38, %v434
  %v436 = vsel %vm433, %v435, %v431
  %v437 = vmul.f32 1.0, %v436
  %v438 = vrcp.pop %v422
  %v439 = vmul.f32 %v422, %v438
  %v440 = vsub.f32 1.0, %v439
  %v441 = vmul.f32 %v438, %v440
  %v442 = vadd.f32 %v438, %v441
  %vm443 = vweird.f32 %v422
  %vm444 = vweird.f32 %v438
  %vm445 = vmor %vm443, %vm444
  %v446 = vsel %vm445, %v438, %v442
  %v447 = vand.u32 2147483647, %v422
  %vm448 = vcmp.eq.f32.partialorder %v447, 8.507059e+37
  %v449 = vand.u32 %v422, 2147483648
  %v450 = vor.u32 1.1754944e-38, %v449
  %v451 = vsel %vm448, %v450, %v446
  %v452 = vmul.f32 1.0, %v451
  %v453 = vtanh.pop %v412
  %v454 = vmul.f32 %v437, %v375
  %456 = vrot.lane.b32.xlu0 %v453, 64
  %v457 = vpop.permute.xlu0 %456
  %v459 = vmul.f32 %v437, %v457
  %461 = vrot.lane.b32.xlu0 %v459, 64
  %v462 = vpop.permute.xlu0 %461
  %v464 = vadd.f32 %v454, %v462
  %v465 = vtanh.pop %v464
  %467 = vrot.lane.b32.xlu0 %v465, 64
  %v468 = vpop.permute.xlu0 %467
  %v470 = vmul.f32 %v452, %v468
  %471 = vst.msk [vmem:[#allocation2 + $0x8] sm:$0xff] %vm103, %v470
  %472 = vst.msk [vmem:[#allocation2 + $0x30] sm:$0xff] %vm383, %v470
  %v473 = vpack.c.bf16 %v470, %v470
  %v475 = vsel %vm296, %v473, 0
  %477 = vmatpush.bf16.msra.mxu0 0
  %478 = vmatpush.bf16.msra.mxu0 0
  %479 = vmatpush.bf16.msra.mxu0 0
  %480 = vmatpush.bf16.msra.mxu0 0
  %481 = vmatpush.bf16.msra.mxu0 %v286
  %482 = vmatpush.bf16.msra.mxu0 %v284
  %483 = vmatpush.bf16.msra.mxu0 %v282
  %484 = vmatpush.bf16.msra.mxu0 %v280
  %485 = vmatmul.bf16.gmra.mxu0 %v475
  %v486 = vpop.f32.mrf.mxu0
  %v487 = vadd.f32 %v236, %v486
  %v488 = vpop.f32.mrf.mxu0
  %489 = vdwg.mxu0
  %490 = vmatpush.bf16.msra.mxu0 0
  %491 = vmatpush.bf16.msra.mxu0 0
  %492 = vmatpush.bf16.msra.mxu0 0
  %493 = vmatpush.bf16.msra.mxu0 0
  %494 = vmatpush.bf16.msra.mxu0 %v287
  %495 = vmatpush.bf16.msra.mxu0 %v285
  %496 = vmatpush.bf16.msra.mxu0 %v283
  %497 = vmatpush.bf16.msra.mxu0 %v281
  %498 = vmatmul.bf16.gmra.mxu0 %v475
  %v499 = vpop.f32.mrf.mxu0
  %v500 = vadd.f32 %v237, %v499
  %v501 = vpop.f32.mrf.mxu0
  %502 = vdwg.mxu0
  %v503 = vxor.u32 %v487, 2147483648
  %v504 = vxor.u32 %v500, 2147483648
  %v505 = vmul.f32 %v503, 1.442695
  %v506 = vpow.pop %v505
  %v507 = vmul.f32 %v504, 1.442695
  %v508 = vpow.pop %v507
  %v509 = vadd.f32 %v506, 1.0
  %v510 = vadd.f32 %v508, 1.0
  %v511 = vrcp.pop %v509
  %v512 = vmul.f32 %v509, %v511
  %v513 = vsub.f32 1.0, %v512
  %v514 = vmul.f32 %v511, %v513
  %v515 = vadd.f32 %v511, %v514
  %vm516 = vweird.f32 %v509
  %vm517 = vweird.f32 %v511
  %vm518 = vmor %vm516, %vm517
  %v519 = vsel %vm518, %v511, %v515
  %v520 = vand.u32 2147483647, %v509
  %vm521 = vcmp.eq.f32.partialorder %v520, 8.507059e+37
  %v522 = vand.u32 %v509, 2147483648
  %v523 = vor.u32 1.1754944e-38, %v522
  %v524 = vsel %vm521, %v523, %v519
  %v525 = vmul.f32 1.0, %v524
  %v526 = vrcp.pop %v510
  %v527 = vmul.f32 %v510, %v526
  %v528 = vsub.f32 1.0, %v527
  %v529 = vmul.f32 %v526, %v528
  %v530 = vadd.f32 %v526, %v529
  %vm531 = vweird.f32 %v510
  %vm532 = vweird.f32 %v526
  %vm533 = vmor %vm531, %vm532
  %v534 = vsel %vm533, %v526, %v530
  %v535 = vand.u32 2147483647, %v510
  %vm536 = vcmp.eq.f32.partialorder %v535, 8.507059e+37
  %v537 = vand.u32 %v510, 2147483648
  %v538 = vor.u32 1.1754944e-38, %v537
  %v539 = vsel %vm536, %v538, %v534
  %v540 = vmul.f32 1.0, %v539
  %v541 = vtanh.pop %v500
  %v542 = vmul.f32 %v525, %v464
  %544 = vrot.lane.b32.xlu0 %v541, 64
  %v545 = vpop.permute.xlu0 %544
  %v547 = vmul.f32 %v525, %v545
  %549 = vrot.lane.b32.xlu0 %v547, 64
  %v550 = vpop.permute.xlu0 %549
  %v552 = vadd.f32 %v542, %v550
  %v553 = vtanh.pop %v552
  %555 = vrot.lane.b32.xlu0 %v553, 64
  %v556 = vpop.permute.xlu0 %555
  %v558 = vmul.f32 %v540, %v556
  %559 = vst.msk [vmem:[#allocation2 + $0x10] sm:$0xff] %vm103, %v558
  %560 = vst.msk [vmem:[#allocation2 + $0x28] sm:$0xff] %vm383, %v558
  %v561 = vpack.c.bf16 %v558, %v558
  %v563 = vsel %vm296, %v561, 0
  %565 = vmatpush.bf16.msra.mxu0 0
  %566 = vmatpush.bf16.msra.mxu0 0
  %567 = vmatpush.bf16.msra.mxu0 0
  %568 = vmatpush.bf16.msra.mxu0 0
  %569 = vmatpush.bf16.msra.mxu0 %v286
  %570 = vmatpush.bf16.msra.mxu0 %v284
  %571 = vmatpush.bf16.msra.mxu0 %v282
  %572 = vmatpush.bf16.msra.mxu0 %v280
  %573 = vmatmul.bf16.gmra.mxu0 %v563
  %v574 = vpop.f32.mrf.mxu0
  %v575 = vadd.f32 %v238, %v574
  %v576 = vpop.f32.mrf.mxu0
  %577 = vdwg.mxu0
  %578 = vmatpush.bf16.msra.mxu0 0
  %579 = vmatpush.bf16.msra.mxu0 0
  %580 = vmatpush.bf16.msra.mxu0 0
  %581 = vmatpush.bf16.msra.mxu0 0
  %582 = vmatpush.bf16.msra.mxu0 %v287
  %583 = vmatpush.bf16.msra.mxu0 %v285
  %584 = vmatpush.bf16.msra.mxu0 %v283
  %585 = vmatpush.bf16.msra.mxu0 %v281
  %586 = vmatmul.bf16.gmra.mxu0 %v563
  %v587 = vpop.f32.mrf.mxu0
  %v588 = vadd.f32 %v239, %v587
  %v589 = vpop.f32.mrf.mxu0
  %590 = vdwg.mxu0
  %v591 = vxor.u32 %v575, 2147483648
  %v592 = vxor.u32 %v588, 2147483648
  %v593 = vmul.f32 %v591, 1.442695
  %v594 = vpow.pop %v593
  %v595 = vmul.f32 %v592, 1.442695
  %v596 = vpow.pop %v595
  %v597 = vadd.f32 %v594, 1.0
  %v598 = vadd.f32 %v596, 1.0
  %v599 = vrcp.pop %v597
  %v600 = vmul.f32 %v597, %v599
  %v601 = vsub.f32 1.0, %v600
  %v602 = vmul.f32 %v599, %v601
  %v603 = vadd.f32 %v599, %v602
  %vm604 = vweird.f32 %v597
  %vm605 = vweird.f32 %v599
  %vm606 = vmor %vm604, %vm605
  %v607 = vsel %vm606, %v599, %v603
  %v608 = vand.u32 2147483647, %v597
  %vm609 = vcmp.eq.f32.partialorder %v608, 8.507059e+37
  %v610 = vand.u32 %v597, 2147483648
  %v611 = vor.u32 1.1754944e-38, %v610
  %v612 = vsel %vm609, %v611, %v607
  %v613 = vmul.f32 1.0, %v612
  %v614 = vrcp.pop %v598
  %v615 = vmul.f32 %v598, %v614
  %v616 = vsub.f32 1.0, %v615
  %v617 = vmul.f32 %v614, %v616
  %v618 = vadd.f32 %v614, %v617
  %vm619 = vweird.f32 %v598
  %vm620 = vweird.f32 %v614
  %vm621 = vmor %vm619, %vm620
  %v622 = vsel %vm621, %v614, %v618
  %v623 = vand.u32 2147483647, %v598
  %vm624 = vcmp.eq.f32.partialorder %v623, 8.507059e+37
  %v625 = vand.u32 %v598, 2147483648
  %v626 = vor.u32 1.1754944e-38, %v625
  %v627 = vsel %vm624, %v626, %v622
  %v628 = vmul.f32 1.0, %v627
  %v629 = vtanh.pop %v588
  %v630 = vmul.f32 %v613, %v552
  %632 = vrot.lane.b32.xlu0 %v629, 64
  %v633 = vpop.permute.xlu0 %632
  %v635 = vmul.f32 %v613, %v633
  %637 = vrot.lane.b32.xlu0 %v635, 64
  %v638 = vpop.permute.xlu0 %637
  %v640 = vadd.f32 %v630, %v638
  %v641 = vtanh.pop %v640
  %643 = vrot.lane.b32.xlu0 %v641, 64
  %v644 = vpop.permute.xlu0 %643
  %v646 = vmul.f32 %v628, %v644
  %647 = vst.msk [vmem:[#allocation2 + $0x18] sm:$0xff] %vm103, %v646
  %648 = vst.msk [vmem:[#allocation2 + $0x20] sm:$0xff] %vm383, %v646
  %v649 = vpack.c.bf16 %v646, %v646
  %v651 = vsel %vm296, %v649, 0
  %653 = vmatpush.bf16.msra.mxu0 0
  %654 = vmatpush.bf16.msra.mxu0 0
  %655 = vmatpush.bf16.msra.mxu0 0
  %656 = vmatpush.bf16.msra.mxu0 0
  %657 = vmatpush.bf16.msra.mxu0 %v286
  %658 = vmatpush.bf16.msra.mxu0 %v284
  %659 = vmatpush.bf16.msra.mxu0 %v282
  %660 = vmatpush.bf16.msra.mxu0 %v280
  %661 = vmatmul.bf16.gmra.mxu0 %v651
  %v662 = vpop.f32.mrf.mxu0
  %v663 = vadd.f32 %v240, %v662
  %v664 = vpop.f32.mrf.mxu0
  %665 = vdwg.mxu0
  %666 = vmatpush.bf16.msra.mxu0 0
  %667 = vmatpush.bf16.msra.mxu0 0
  %668 = vmatpush.bf16.msra.mxu0 0
  %669 = vmatpush.bf16.msra.mxu0 0
  %670 = vmatpush.bf16.msra.mxu0 %v287
  %671 = vmatpush.bf16.msra.mxu0 %v285
  %672 = vmatpush.bf16.msra.mxu0 %v283
  %673 = vmatpush.bf16.msra.mxu0 %v281
  %674 = vmatmul.bf16.gmra.mxu0 %v651
  %v675 = vpop.f32.mrf.mxu0
  %v676 = vadd.f32 %v241, %v675
  %v677 = vpop.f32.mrf.mxu0
  %678 = vdwg.mxu0
  %v679 = vxor.u32 %v663, 2147483648
  %v680 = vxor.u32 %v676, 2147483648
  %v681 = vmul.f32 %v679, 1.442695
  %v682 = vpow.pop %v681
  %v683 = vmul.f32 %v680, 1.442695
  %v684 = vpow.pop %v683
  %v685 = vadd.f32 %v682, 1.0
  %v686 = vadd.f32 %v684, 1.0
  %v687 = vrcp.pop %v685
  %v688 = vmul.f32 %v685, %v687
  %v689 = vsub.f32 1.0, %v688
  %v690 = vmul.f32 %v687, %v689
  %v691 = vadd.f32 %v687, %v690
  %vm692 = vweird.f32 %v685
  %vm693 = vweird.f32 %v687
  %vm694 = vmor %vm692, %vm693
  %v695 = vsel %vm694, %v687, %v691
  %v696 = vand.u32 2147483647, %v685
  %vm697 = vcmp.eq.f32.partialorder %v696, 8.507059e+37
  %v698 = vand.u32 %v685, 2147483648
  %v699 = vor.u32 1.1754944e-38, %v698
  %v700 = vsel %vm697, %v699, %v695
  %v701 = vmul.f32 1.0, %v700
  %v702 = vrcp.pop %v686
  %v703 = vmul.f32 %v686, %v702
  %v704 = vsub.f32 1.0, %v703
  %v705 = vmul.f32 %v702, %v704
  %v706 = vadd.f32 %v702, %v705
  %vm707 = vweird.f32 %v686
  %vm708 = vweird.f32 %v702
  %vm709 = vmor %vm707, %vm708
  %v710 = vsel %vm709, %v702, %v706
  %v711 = vand.u32 2147483647, %v686
  %vm712 = vcmp.eq.f32.partialorder %v711, 8.507059e+37
  %v713 = vand.u32 %v686, 2147483648
  %v714 = vor.u32 1.1754944e-38, %v713
  %v715 = vsel %vm712, %v714, %v710
  %v716 = vmul.f32 1.0, %v715
  %v717 = vtanh.pop %v676
  %v718 = vmul.f32 %v701, %v640
  %720 = vrot.lane.b32.xlu0 %v717, 64
  %v721 = vpop.permute.xlu0 %720
  %v723 = vmul.f32 %v701, %v721
  %725 = vrot.lane.b32.xlu0 %v723, 64
  %v726 = vpop.permute.xlu0 %725
  %v728 = vadd.f32 %v718, %v726
  %v729 = vtanh.pop %v728
  %731 = vrot.lane.b32.xlu0 %v729, 64
  %v732 = vpop.permute.xlu0 %731
  %v734 = vmul.f32 %v716, %v732
  %735 = vst.msk [vmem:[#allocation2 + $0x20] sm:$0xff] %vm103, %v734
  %736 = vst.msk [vmem:[#allocation2 + $0x18] sm:$0xff] %vm383, %v734
  %v737 = vpack.c.bf16 %v734, %v734
  %v739 = vsel %vm296, %v737, 0
  %741 = vmatpush.bf16.msra.mxu0 0
  %742 = vmatpush.bf16.msra.mxu0 0
  %743 = vmatpush.bf16.msra.mxu0 0
  %744 = vmatpush.bf16.msra.mxu0 0
  %745 = vmatpush.bf16.msra.mxu0 %v286
  %746 = vmatpush.bf16.msra.mxu0 %v284
  %747 = vmatpush.bf16.msra.mxu0 %v282
  %748 = vmatpush.bf16.msra.mxu0 %v280
  %749 = vmatmul.bf16.gmra.mxu0 %v739
  %v750 = vpop.f32.mrf.mxu0
  %v751 = vadd.f32 %v242, %v750
  %v752 = vpop.f32.mrf.mxu0
  %753 = vdwg.mxu0
  %754 = vmatpush.bf16.msra.mxu0 0
  %755 = vmatpush.bf16.msra.mxu0 0
  %756 = vmatpush.bf16.msra.mxu0 0
  %757 = vmatpush.bf16.msra.mxu0 0
  %758 = vmatpush.bf16.msra.mxu0 %v287
  %759 = vmatpush.bf16.msra.mxu0 %v285
  %760 = vmatpush.bf16.msra.mxu0 %v283
  %761 = vmatpush.bf16.msra.mxu0 %v281
  %762 = vmatmul.bf16.gmra.mxu0 %v739
  %v763 = vpop.f32.mrf.mxu0
  %v764 = vadd.f32 %v243, %v763
  %v765 = vpop.f32.mrf.mxu0
  %766 = vdwg.mxu0
  %v767 = vxor.u32 %v751, 2147483648
  %v768 = vxor.u32 %v764, 2147483648
  %v769 = vmul.f32 %v767, 1.442695
  %v770 = vpow.pop %v769
  %v771 = vmul.f32 %v768, 1.442695
  %v772 = vpow.pop %v771
  %v773 = vadd.f32 %v770, 1.0
  %v774 = vadd.f32 %v772, 1.0
  %v775 = vrcp.pop %v773
  %v776 = vmul.f32 %v773, %v775
  %v777 = vsub.f32 1.0, %v776
  %v778 = vmul.f32 %v775, %v777
  %v779 = vadd.f32 %v775, %v778
  %vm780 = vweird.f32 %v773
  %vm781 = vweird.f32 %v775
  %vm782 = vmor %vm780, %vm781
  %v783 = vsel %vm782, %v775, %v779
  %v784 = vand.u32 2147483647, %v773
  %vm785 = vcmp.eq.f32.partialorder %v784, 8.507059e+37
  %v786 = vand.u32 %v773, 2147483648
  %v787 = vor.u32 1.1754944e-38, %v786
  %v788 = vsel %vm785, %v787, %v783
  %v789 = vmul.f32 1.0, %v788
  %v790 = vrcp.pop %v774
  %v791 = vmul.f32 %v774, %v790
  %v792 = vsub.f32 1.0, %v791
  %v793 = vmul.f32 %v790, %v792
  %v794 = vadd.f32 %v790, %v793
  %vm795 = vweird.f32 %v774
  %vm796 = vweird.f32 %v790
  %vm797 = vmor %vm795, %vm796
  %v798 = vsel %vm797, %v790, %v794
  %v799 = vand.u32 2147483647, %v774
  %vm800 = vcmp.eq.f32.partialorder %v799, 8.507059e+37
  %v801 = vand.u32 %v774, 2147483648
  %v802 = vor.u32 1.1754944e-38, %v801
  %v803 = vsel %vm800, %v802, %v798
  %v804 = vmul.f32 1.0, %v803
  %v805 = vtanh.pop %v764
  %v806 = vmul.f32 %v789, %v728
  %808 = vrot.lane.b32.xlu0 %v805, 64
  %v809 = vpop.permute.xlu0 %808
  %v811 = vmul.f32 %v789, %v809
  %813 = vrot.lane.b32.xlu0 %v811, 64
  %v814 = vpop.permute.xlu0 %813
  %v816 = vadd.f32 %v806, %v814
  %v817 = vtanh.pop %v816
  %819 = vrot.lane.b32.xlu0 %v817, 64
  %v820 = vpop.permute.xlu0 %819
  %v822 = vmul.f32 %v804, %v820
  %823 = vst.msk [vmem:[#allocation2 + $0x28] sm:$0xff] %vm103, %v822
  %824 = vst.msk [vmem:[#allocation2 + $0x10] sm:$0xff] %vm383, %v822
  %v825 = vpack.c.bf16 %v822, %v822
  %v827 = vsel %vm296, %v825, 0
  %829 = vmatpush.bf16.msra.mxu0 0
  %830 = vmatpush.bf16.msra.mxu0 0
  %831 = vmatpush.bf16.msra.mxu0 0
  %832 = vmatpush.bf16.msra.mxu0 0
  %833 = vmatpush.bf16.msra.mxu0 %v286
  %834 = vmatpush.bf16.msra.mxu0 %v284
  %835 = vmatpush.bf16.msra.mxu0 %v282
  %836 = vmatpush.bf16.msra.mxu0 %v280
  %837 = vmatmul.bf16.gmra.mxu0 %v827
  %v838 = vpop.f32.mrf.mxu0
  %v839 = vadd.f32 %v244, %v838
  %v840 = vpop.f32.mrf.mxu0
  %841 = vdwg.mxu0
  %842 = vmatpush.bf16.msra.mxu0 0
  %843 = vmatpush.bf16.msra.mxu0 0
  %844 = vmatpush.bf16.msra.mxu0 0
  %845 = vmatpush.bf16.msra.mxu0 0
  %846 = vmatpush.bf16.msra.mxu0 %v287
  %847 = vmatpush.bf16.msra.mxu0 %v285
  %848 = vmatpush.bf16.msra.mxu0 %v283
  %849 = vmatpush.bf16.msra.mxu0 %v281
  %850 = vmatmul.bf16.gmra.mxu0 %v827
  %v851 = vpop.f32.mrf.mxu0
  %v852 = vadd.f32 %v245, %v851
  %v853 = vpop.f32.mrf.mxu0
  %854 = vdwg.mxu0
  %v855 = vxor.u32 %v839, 2147483648
  %v856 = vxor.u32 %v852, 2147483648
  %v857 = vmul.f32 %v855, 1.442695
  %v858 = vpow.pop %v857
  %v859 = vmul.f32 %v856, 1.442695
  %v860 = vpow.pop %v859
  %v861 = vadd.f32 %v858, 1.0
  %v862 = vadd.f32 %v860, 1.0
  %v863 = vrcp.pop %v861
  %v864 = vmul.f32 %v861, %v863
  %v865 = vsub.f32 1.0, %v864
  %v866 = vmul.f32 %v863, %v865
  %v867 = vadd.f32 %v863, %v866
  %vm868 = vweird.f32 %v861
  %vm869 = vweird.f32 %v863
  %vm870 = vmor %vm868, %vm869
  %v871 = vsel %vm870, %v863, %v867
  %v872 = vand.u32 2147483647, %v861
  %vm873 = vcmp.eq.f32.partialorder %v872, 8.507059e+37
  %v874 = vand.u32 %v861, 2147483648
  %v875 = vor.u32 1.1754944e-38, %v874
  %v876 = vsel %vm873, %v875, %v871
  %v877 = vmul.f32 1.0, %v876
  %v878 = vrcp.pop %v862
  %v879 = vmul.f32 %v862, %v878
  %v880 = vsub.f32 1.0, %v879
  %v881 = vmul.f32 %v878, %v880
  %v882 = vadd.f32 %v878, %v881
  %vm883 = vweird.f32 %v862
  %vm884 = vweird.f32 %v878
  %vm885 = vmor %vm883, %vm884
  %v886 = vsel %vm885, %v878, %v882
  %v887 = vand.u32 2147483647, %v862
  %vm888 = vcmp.eq.f32.partialorder %v887, 8.507059e+37
  %v889 = vand.u32 %v862, 2147483648
  %v890 = vor.u32 1.1754944e-38, %v889
  %v891 = vsel %vm888, %v890, %v886
  %v892 = vmul.f32 1.0, %v891
  %v893 = vtanh.pop %v852
  %v894 = vmul.f32 %v877, %v816
  %896 = vrot.lane.b32.xlu0 %v893, 64
  %v897 = vpop.permute.xlu0 %896
  %v899 = vmul.f32 %v877, %v897
  %901 = vrot.lane.b32.xlu0 %v899, 64
  %v902 = vpop.permute.xlu0 %901
  %v904 = vadd.f32 %v894, %v902
  %v905 = vtanh.pop %v904
  %907 = vrot.lane.b32.xlu0 %v905, 64
  %v908 = vpop.permute.xlu0 %907
  %v910 = vmul.f32 %v892, %v908
  %911 = vst.msk [vmem:[#allocation2 + $0x30] sm:$0xff] %vm103, %v910
  %912 = vst.msk [vmem:[#allocation2 + $0x8] sm:$0xff] %vm383, %v910
  %v913 = vpack.c.bf16 %v910, %v910
  %v915 = vsel %vm296, %v913, 0
  %917 = vmatpush.bf16.msra.mxu0 0
  %918 = vmatpush.bf16.msra.mxu0 0
  %919 = vmatpush.bf16.msra.mxu0 0
  %920 = vmatpush.bf16.msra.mxu0 0
  %921 = vmatpush.bf16.msra.mxu0 %v286
  %922 = vmatpush.bf16.msra.mxu0 %v284
  %923 = vmatpush.bf16.msra.mxu0 %v282
  %924 = vmatpush.bf16.msra.mxu0 %v280
  %925 = vmatmul.bf16.gmra.mxu0 %v915
  %v926 = vpop.f32.mrf.mxu0
  %v927 = vadd.f32 %v246, %v926
  %v928 = vpop.f32.mrf.mxu0
  %929 = vdwg.mxu0
  %930 = vmatpush.bf16.msra.mxu0 0
  %931 = vmatpush.bf16.msra.mxu0 0
  %932 = vmatpush.bf16.msra.mxu0 0
  %933 = vmatpush.bf16.msra.mxu0 0
  %934 = vmatpush.bf16.msra.mxu0 %v287
  %935 = vmatpush.bf16.msra.mxu0 %v285
  %936 = vmatpush.bf16.msra.mxu0 %v283
  %937 = vmatpush.bf16.msra.mxu0 %v281
  %938 = vmatmul.bf16.gmra.mxu0 %v915
  %v939 = vpop.f32.mrf.mxu0
  %v940 = vadd.f32 %v247, %v939
  %v941 = vpop.f32.mrf.mxu0
  %942 = vdwg.mxu0
  %v943 = vxor.u32 %v927, 2147483648
  %v944 = vxor.u32 %v940, 2147483648
  %v945 = vmul.f32 %v943, 1.442695
  %v946 = vpow.pop %v945
  %v947 = vmul.f32 %v944, 1.442695
  %v948 = vpow.pop %v947
  %v949 = vadd.f32 %v946, 1.0
  %v950 = vadd.f32 %v948, 1.0
  %v951 = vrcp.pop %v949
  %v952 = vmul.f32 %v949, %v951
  %v953 = vsub.f32 1.0, %v952
  %v954 = vmul.f32 %v951, %v953
  %v955 = vadd.f32 %v951, %v954
  %vm956 = vweird.f32 %v949
  %vm957 = vweird.f32 %v951
  %vm958 = vmor %vm956, %vm957
  %v959 = vsel %vm958, %v951, %v955
  %v960 = vand.u32 2147483647, %v949
  %vm961 = vcmp.eq.f32.partialorder %v960, 8.507059e+37
  %v962 = vand.u32 %v949, 2147483648
  %v963 = vor.u32 1.1754944e-38, %v962
  %v964 = vsel %vm961, %v963, %v959
  %v965 = vmul.f32 1.0, %v964
  %v966 = vrcp.pop %v950
  %v967 = vmul.f32 %v950, %v966
  %v968 = vsub.f32 1.0, %v967
  %v969 = vmul.f32 %v966, %v968
  %v970 = vadd.f32 %v966, %v969
  %vm971 = vweird.f32 %v950
  %vm972 = vweird.f32 %v966
  %vm973 = vmor %vm971, %vm972
  %v974 = vsel %vm973, %v966, %v970
  %v975 = vand.u32 2147483647, %v950
  %vm976 = vcmp.eq.f32.partialorder %v975, 8.507059e+37
  %v977 = vand.u32 %v950, 2147483648
  %v978 = vor.u32 1.1754944e-38, %v977
  %v979 = vsel %vm976, %v978, %v974
  %v980 = vmul.f32 1.0, %v979
  %v981 = vtanh.pop %v940
  %v982 = vmul.f32 %v965, %v904
  %984 = vrot.lane.b32.xlu0 %v981, 64
  %v985 = vpop.permute.xlu0 %984
  %v987 = vmul.f32 %v965, %v985
  %989 = vrot.lane.b32.xlu0 %v987, 64
  %v990 = vpop.permute.xlu0 %989
  %v992 = vadd.f32 %v982, %v990
  %v993 = vtanh.pop %v992
  %995 = vrot.lane.b32.xlu0 %v993, 64
  %v996 = vpop.permute.xlu0 %995
  %v998 = vmul.f32 %v980, %v996
  %999 = vst.msk [vmem:[#allocation2 + $0x38] sm:$0xff] %vm103, %v998
  %1000 = vst.msk [vmem:[#allocation2] sm:$0xff] %vm383, %v998
  %v1001 = vld [vmem:[#allocation2] sm:$0xff]
  %v1002 = vld [vmem:[#allocation2 + $0x8] sm:$0xff]
  %v1003 = vld [vmem:[#allocation2 + $0x10] sm:$0xff]
  %v1004 = vld [vmem:[#allocation2 + $0x18] sm:$0xff]
  %v1005 = vld [vmem:[#allocation2 + $0x20] sm:$0xff]
  %v1006 = vld [vmem:[#allocation2 + $0x28] sm:$0xff]
  %v1007 = vld [vmem:[#allocation2 + $0x30] sm:$0xff]
  %v1008 = vld [vmem:[#allocation2 + $0x38] sm:$0xff]
  %v1009 = vpack.c.bf16 %v1002, %v1001
  %v1010 = vpack.c.bf16 %v1004, %v1003
  %v1011 = vpack.c.bf16 %v1006, %v1005
  %v1012 = vpack.c.bf16 %v1008, %v1007
  %v1013 = vld [vmem:[%s4] sm:$0xf]
  %v1014 = vld [vmem:[%s4 + $0x4] sm:$0xf]
  %v1015 = vld [vmem:[%s4 + $0x8] sm:$0xf]
  %v1016 = vld [vmem:[%s4 + $0xc] sm:$0xf]
  %v1017 = vld [vmem:[%s4 + $0x10] sm:$0xf]
  %v1018 = vld [vmem:[%s4 + $0x14] sm:$0xf]
  %v1019 = vld [vmem:[%s4 + $0x18] sm:$0xf]
  %v1020 = vld [vmem:[%s4 + $0x1c] sm:$0xf]
  %v1029 = vunpack.c.l.b16 %v1013
  %v1030 = vunpack.c.l.b16 %v1014
  %v1031 = vunpack.c.l.b16 %v1015
  %v1032 = vunpack.c.l.b16 %v1016
  %v1033 = vunpack.c.l.b16 %v1017
  %v1034 = vunpack.c.l.b16 %v1018
  %v1035 = vunpack.c.l.b16 %v1019
  %v1036 = vunpack.c.l.b16 %v1020
  %v1037 = vpack.c.b16 %v1030, %v1029
  %v1038 = vpack.c.b16 %v1032, %v1031
  %v1039 = vpack.c.b16 %v1034, %v1033
  %v1040 = vpack.c.b16 %v1036, %v1035
  %v1046 = vsel %vm296, %v1009, 0
  %v1049 = vsel %vm296, %v1010, 0
  %v1052 = vsel %vm296, %v1011, 0
  %v1055 = vsel %vm296, %v1012, 0
  %1057 = vmatpush.bf16.msra.mxu0 0
  %1058 = vmatpush.bf16.msra.mxu0 0
  %1059 = vmatpush.bf16.msra.mxu0 0
  %1060 = vmatpush.bf16.msra.mxu0 0
  %1061 = vmatpush.bf16.msra.mxu0 %v1040
  %1062 = vmatpush.bf16.msra.mxu0 %v1039
  %1063 = vmatpush.bf16.msra.mxu0 %v1038
  %1064 = vmatpush.bf16.msra.mxu0 %v1037
  %1065 = vmatmul.bf16.gmra.mxu0 %v1046
  %v1066 = vpop.f32.mrf.mxu0
  %v1067 = vadd.f32 %v184, %v1066
  %v1068 = vpop.f32.mrf.mxu0
  %v1069 = vadd.f32 %v186, %v1068
  %1070 = vmatmul.bf16.gmra.mxu0 %v1049
  %v1071 = vpop.f32.mrf.mxu0
  %v1072 = vadd.f32 %v189, %v1071
  %v1073 = vpop.f32.mrf.mxu0
  %v1074 = vadd.f32 %v191, %v1073
  %1075 = vmatmul.bf16.gmra.mxu0 %v1052
  %v1076 = vpop.f32.mrf.mxu0
  %v1077 = vadd.f32 %v194, %v1076
  %v1078 = vpop.f32.mrf.mxu0
  %v1079 = vadd.f32 %v196, %v1078
  %1080 = vmatmul.bf16.gmra.mxu0 %v1055
  %v1081 = vpop.f32.mrf.mxu0
  %v1082 = vadd.f32 %v199, %v1081
  %v1083 = vpop.f32.mrf.mxu0
  %v1084 = vadd.f32 %v201, %v1083
  %1085 = vdwg.mxu0
  %v1086 = vtanh.pop %v1067
  %v1087 = vtanh.pop %v1069
  %v1088 = vtanh.pop %v1072
  %v1089 = vtanh.pop %v1074
  %v1090 = vtanh.pop %v1077
  %v1091 = vtanh.pop %v1079
  %v1092 = vtanh.pop %v1082
  %v1093 = vtanh.pop %v1084
  %v1094 = vmax.f32 %v1086, %v1087
  %v1095 = vmax.f32 %v1094, %v1088
  %v1096 = vmax.f32 %v1095, %v1089
  %v1097 = vmax.f32 %v1096, %v1090
  %v1098 = vmax.f32 %v1097, %v1091
  %v1099 = vmax.f32 %v1098, %v1092
  %v1100 = vmax.f32 %v1099, %v1093
  %v1101 = vpack.c.bf16 %v1100, %v1100
  %v1102 = vld [vmem:[%s5] sm:$0xf]
  %v1103 = vld [vmem:[%s5 + $0x4] sm:$0xf]
  %v1104 = vld [vmem:[%s5 + $0x8] sm:$0xf]
  %v1105 = vld [vmem:[%s5 + $0xc] sm:$0xf]
  %v1106 = vld [vmem:[%s5 + $0x10] sm:$0xf]
  %v1107 = vld [vmem:[%s5 + $0x14] sm:$0xf]
  %v1108 = vld [vmem:[%s5 + $0x18] sm:$0xf]
  %v1109 = vld [vmem:[%s5 + $0x1c] sm:$0xf]
  %v1110 = vld [vmem:[%s6] sm:$0x1]
  %v1112 = vperm.slane %v1110, 0
  %v1122 = vunpack.c.l.b16 %v1102
  %v1123 = vunpack.c.l.b16 %v1103
  %v1124 = vunpack.c.l.b16 %v1104
  %v1125 = vunpack.c.l.b16 %v1105
  %v1126 = vunpack.c.l.b16 %v1106
  %v1127 = vunpack.c.l.b16 %v1107
  %v1128 = vunpack.c.l.b16 %v1108
  %v1129 = vunpack.c.l.b16 %v1109
  %v1130 = vpack.c.b16 %v1123, %v1122
  %v1131 = vpack.c.b16 %v1125, %v1124
  %v1132 = vpack.c.b16 %v1127, %v1126
  %v1133 = vpack.c.b16 %v1129, %v1128
  %v1139 = vsel %vm296, %v1101, 0
  %1141 = vmatpush.bf16.msra.mxu0 0
  %1142 = vmatpush.bf16.msra.mxu0 0
  %1143 = vmatpush.bf16.msra.mxu0 0
  %1144 = vmatpush.bf16.msra.mxu0 0
  %1145 = vmatpush.bf16.msra.mxu0 %v1133
  %1146 = vmatpush.bf16.msra.mxu0 %v1132
  %1147 = vmatpush.bf16.msra.mxu0 %v1131
  %1148 = vmatpush.bf16.msra.mxu0 %v1130
  %1149 = vmatmul.bf16.gmra.mxu0 %v1139
  %v1150 = vpop.f32.mrf.mxu0
  %v1151 = vadd.f32 %v1112, %v1150
  %v1152 = vpop.f32.mrf.mxu0
  %1153 = vdwg.mxu0
  %1154 = vst [vmem:[%s7] sm:$0xff] %v1151
  // Predicated region
  $region30: #{textrcnn_forward.1} parent=0 // pred_check
    _
  $region31: #{textrcnn_forward.1} parent=0 // pred_check_branch
    %1156 = sbr.rel (0) target = $region33
  $region32: #{textrcnn_forward.1} parent=0 // pred_region
    _
  $region33: #{textrcnn_forward.1} parent=0 // pred_fallthru
    _
  // Predicated region
  $region34: #{textrcnn_forward.1} parent=0 // pred_check
    _
  $region35: #{textrcnn_forward.1} parent=0 // pred_check_branch
    %1158 = sbr.rel (0) target = $region37
  $region36: #{textrcnn_forward.1} parent=0 // pred_region
    _
  $region37: #{textrcnn_forward.1} parent=0 // pred_fallthru
    _

</llo_original>
